<compile_context>
chip_gen: v7x
topology: tpu7x:2x2x1
jax: 0.10.0
libtpu: 0.0.40
codegen_flags: <defaults>
</compile_context>

<pallas_src>
import functools

import jax
import jax.numpy as jnp
from jax import lax
from jax.experimental import pallas as pl
from jax.experimental.pallas import tpu as pltpu


def _rup(x, m):
    return ((x + m - 1) // m) * m


def _decoder_block_kernel(Wp, xg_ref, w1_ref, b1_ref, w2_ref, b2_ref,
                          mask_ref, o_ref, hg_ref, xstk_ref, hstk_ref):
    # Wp      : static padded row pitch (W + 2), closed over via partial.
    # xg_ref  : (1, Cin_p, Lx)      guarded, zero-padded, row-major flat input
    # w1_ref  : (Cmid_p, 9*Cin_p)   3x3 conv taps folded into contraction dim
    # b1_ref  : (Cmid_p, 1)
    # w2_ref  : (4*Cout, 9*Cmid_p)  all 4 parities x taps folded (zero-filled)
    # b2_ref  : (4*Cout, 1)
    # mask_ref: (1, Lh)             1.0 on valid h positions, 0.0 on pad/guard
    # o_ref   : (1, 4*Cout, L)      parity-on-sublane, lane-padded output
    # hg_ref  : VMEM (Cmid_p, Lh)   fused ReLU(conv3x3) intermediate (+halo)
    # xstk_ref: VMEM (9*Cin_p, Lh)  stacked-window RHS for stage 1
    # hstk_ref: VMEM (9*Cmid_p, L)  stacked-window RHS for stage 2
    Cin_p = xg_ref.shape[1]
    Cmid_p, Lh = hg_ref.shape
    L = o_ref.shape[2]

    # ---- stage 1: Conv2d(3x3, pad=1) + bias + ReLU as ONE matmul ------------
    # Each tap is a contiguous lane-offset window of the guarded input; the 9
    # windows are stacked on sublanes so the whole conv is K = 9*Cin_p.
    for k in range(9):
        off = (k // 3) * Wp + (k % 3)
        xstk_ref[k * Cin_p:(k + 1) * Cin_p, :] = xg_ref[0, :, off:off + Lh]
    h = jnp.dot(w1_ref[...], xstk_ref[...],
                preferred_element_type=jnp.float32)
    # Mask zeroes the 1-pixel halo + guard so stage 2 sees exact zero padding.
    hg_ref[...] = jnp.maximum(h + b1_ref[...], 0.0) * mask_ref[...]

    # ---- stage 2: ConvTranspose2d(4, s=2, p=1) + bias + ReLU ----------------
    # Polyphase decomposition: the 4 output parities only need 9 distinct
    # windows of hg.  Slice each window exactly once, then ONE matmul emits
    # all 4 parities stacked on the sublane axis (no HBM round trip).
    for q in range(9):
        off = (q // 3) * Wp + (q % 3)
        hstk_ref[q * Cmid_p:(q + 1) * Cmid_p, :] = hg_ref[:, off:off + L]
    y = jnp.dot(w2_ref[...], hstk_ref[...],
                preferred_element_type=jnp.float32)
    o_ref[0] = jnp.maximum(y + b2_ref[...], 0.0)


def decoder_block_forward(x_nchw, params):
    """x: (N, Cin, H, W) -> (N, Cout, 2H, 2W); DecoderBlock(is_deconv=True)."""
    N, Cin, H, W = x_nchw.shape
    Cmid_p = params["w1s"].shape[0]
    Cin_p = params["w1s"].shape[1] // 9
    Cout = params["b2c"].shape[0] // 4

    Hp, Wp = H + 2, W + 2
    L = Hp * Wp                          # exact flattened spatial length
    Lpad = _rup(L, 128)                  # lane-dense output length
    Lh = _rup(Lpad + 2 * Wp + 2, 128)    # stage-1 intermediate incl. halo
    Lx = _rup(Lh + 2 * Wp + 2, 128)      # guarded flattened input length
    # Layout invariants the mask/guard scheme relies on (see review note).
    assert Lh >= Lpad + 2 * Wp + 2 and Lx >= Lh + 2 * Wp + 2
    assert Cin_p % 8 == 0 and Cmid_p % 8 == 0

    # 1-pixel zero pad + channel pad + row-major flatten (pitch Wp) + guard
    # zeros front/back.  Every conv tap in the kernel is then a contiguous
    # lane-offset window of a VMEM ref.
    xp = jnp.pad(x_nchw, ((0, 0), (0, Cin_p - Cin), (1, 1), (1, 1)))
    xflat = xp.reshape(N, Cin_p, L)
    front = 2 * Wp + 2
    xg = jnp.pad(xflat, ((0, 0), (0, 0), (front, Lx - L - front)))

    # Validity mask for the fused intermediate (1 on the HxW interior only).
    tau = jnp.arange(Lh) - (Wp + 1)
    u, v = tau // Wp, tau % Wp           # negatives safe: tau>=0 is ANDed in
    mask = ((tau >= 0) & (u >= 1) & (u <= H) & (v >= 1) & (v <= W))
    mask = mask.astype(jnp.float32).reshape(1, Lh)

    kernel = functools.partial(_decoder_block_kernel, Wp)
    out = pl.pallas_call(
        kernel,
        out_shape=jax.ShapeDtypeStruct((N, 4 * Cout, Lpad), jnp.float32),
        grid_spec=pltpu.PrefetchScalarGridSpec(
            num_scalar_prefetch=0,
            grid=(N,),
            in_specs=[
                pl.BlockSpec((1, Cin_p, Lx), lambda n: (n, 0, 0)),
                pl.BlockSpec((Cmid_p, 9 * Cin_p), lambda n: (0, 0)),
                pl.BlockSpec((Cmid_p, 1), lambda n: (0, 0)),
                pl.BlockSpec((4 * Cout, 9 * Cmid_p), lambda n: (0, 0)),
                pl.BlockSpec((4 * Cout, 1), lambda n: (0, 0)),
                pl.BlockSpec((1, Lh), lambda n: (0, 0)),
            ],
            out_specs=pl.BlockSpec((1, 4 * Cout, Lpad), lambda n: (n, 0, 0)),
            scratch_shapes=[
                pltpu.VMEM((Cmid_p, Lh), jnp.float32),
                pltpu.VMEM((9 * Cin_p, Lh), jnp.float32),
                pltpu.VMEM((9 * Cmid_p, Lpad), jnp.float32),
            ],
        ),
        compiler_params=pltpu.CompilerParams(
            dimension_semantics=("parallel",)),
    )(xg, params["w1s"], params["b1c"], params["w2s"], params["b2c"], mask)

    # Polyphase (padded-pitch, parity-on-sublane) -> NCHW interleave.
    # TODO(synk): in a full UNet, keep this layout and fuse the interleave
    # into the next block's kernel to avoid the extra HBM round trip.
    out = out.reshape(N, 2, 2, Cout, Lpad)[:, :, :, :, :L]
    out = out.reshape(N, 2, 2, Cout, Hp, Wp)[:, :, :, :, 1:H + 1, 1:W + 1]
    return out.transpose(0, 3, 4, 1, 5, 2).reshape(N, Cout, 2 * H, 2 * W)


def init_params(key, in_ch, mid_ch, out_ch):
    """Torch-layout params + the prepacked kernel-side layouts."""
    k1, k2, k3, k4 = jax.random.split(key, 4)
    # Conv2d(in_ch, mid_ch, 3, padding=1): weight (Cmid, Cin, 3, 3) OIHW.
    w1 = jax.random.normal(k1, (mid_ch, in_ch, 3, 3), jnp.float32) * 0.1
    b1 = jax.random.normal(k2, (mid_ch,), jnp.float32) * 0.1
    # ConvTranspose2d(mid_ch, out_ch, 4, stride=2, padding=1): (Cmid, Cout, 4, 4).
    wt = jax.random.normal(k3, (mid_ch, out_ch, 4, 4), jnp.float32) * 0.1
    b2 = jax.random.normal(k4, (out_ch,), jnp.float32) * 0.1

    cin_p = _rup(in_ch, 8)
    cmid_p = _rup(mid_ch, 8)

    # Stage 1: taps folded into the contraction dim (channel-padded to 8):
    #   w1s[cm, (3*dy+dx)*Cin_p + ci] = w1[cm, ci, dy, dx]
    w1p = jnp.zeros((cmid_p, cin_p, 3, 3), jnp.float32)
    w1p = w1p.at[:mid_ch, :in_ch].set(w1)
    w1s = jnp.transpose(w1p, (0, 2, 3, 1)).reshape(cmid_p, 9 * cin_p)
    b1c = jnp.zeros((cmid_p, 1), jnp.float32).at[:mid_ch, 0].set(b1)

    # Stage 2 polyphase taps: for output parity (py,px) and tap (dy,dx in {0,1})
    #   y[2r+py, 2c+px, co] = sum_{dy,dx,ci} hpad[r+py+dy, c+px+dx, ci]
    #                                        * wt[ci, co, 3-py-2dy, 3-px-2dx]
    sub = wt[:, :, ::-1, ::-1]                       # sub[ci,co,a,b] = wt[ci,co,3-a,3-b]
    w2t = (sub.reshape(mid_ch, out_ch, 2, 2, 2, 2)   # [ci, co, dy, py, dx, px]
              .transpose(3, 5, 2, 4, 1, 0)           # [py, px, dy, dx, co, ci]
              .reshape(4, 4, out_ch, mid_ch))        # [2*py+px, 2*dy+dx, co, ci]
    # All 4 parities on the output rows; the 9 distinct (a,b) windows on the
    # contraction dim (unused (parity, window) pairs stay zero — free MACs).
    w2s = jnp.zeros((4 * out_ch, 9 * cmid_p), jnp.float32)
    for py in range(2):
        for px in range(2):
            p = 2 * py + px
            for dy in range(2):
                for dx in range(2):
                    q = 3 * (py + dy) + (px + dx)    # window index a*3 + b
                    w2s = w2s.at[p * out_ch:(p + 1) * out_ch,
                                 q * cmid_p:q * cmid_p + mid_ch].set(
                                     w2t[p, 2 * dy + dx])
    b2c = jnp.tile(b2, 4).reshape(4 * out_ch, 1)

    return dict(w1=w1, b1=b1, wt=wt, b2=b2,
                w1s=w1s, b1c=b1c, w2s=w2s, b2c=b2c)


def reference_forward(x, params):
    """Pure-JAX (lax.conv) reference for numerical validation, NCHW."""
    dn = ("NCHW", "OIHW", "NCHW")
    h = lax.conv_general_dilated(x, params["w1"], (1, 1), ((1, 1), (1, 1)),
                                 dimension_numbers=dn)
    h = jnp.maximum(h + params["b1"][None, :, None, None], 0.0)
    # ConvTranspose2d(4, s=2, p=1) == conv over lhs-dilated input with the
    # spatially-flipped, in/out-swapped kernel and padding K-1-p = 2.
    w_conv = jnp.transpose(params["wt"], (1, 0, 2, 3))[:, :, ::-1, ::-1]
    y = lax.conv_general_dilated(h, w_conv, (1, 1), ((2, 2), (2, 2)),
                                 lhs_dilation=(2, 2), dimension_numbers=dn)
    return jnp.maximum(y + params["b2"][None, :, None, None], 0.0)


if __name__ == "__main__":
    key = jax.random.PRNGKey(0)
    kx, kp = jax.random.split(key)

    N, Cin, H, W = 2, 4, 16, 16
    mid_ch, out_ch = 8, 4

    x = jax.random.normal(kx, (N, Cin, H, W), jnp.float32)
    params = init_params(kp, Cin, mid_ch, out_ch)

    fwd = jax.jit(decoder_block_forward)
    out = jax.block_until_ready(fwd(x, params))
    assert out.shape == (N, out_ch, 2 * H, 2 * W), out.shape

    ref = jax.block_until_ready(reference_forward(x, params))
    assert jnp.allclose(out, ref, atol=1e-4, rtol=1e-4), \
        float(jnp.max(jnp.abs(out - ref)))

    print("KERNEL_OK")
</pallas_src>

<mosaic_0001>
module attributes {stable_mosaic.version = 11 : i64} {
  func.func @_decoder_block_kernel(%arg0: i32, %arg1: memref<1x8x640xf32, #tpu.memory_space<vmem>>, %arg2: memref<8x72xf32, #tpu.memory_space<vmem>>, %arg3: memref<8x1xf32, #tpu.memory_space<vmem>>, %arg4: memref<16x72xf32, #tpu.memory_space<vmem>>, %arg5: memref<16x1xf32, #tpu.memory_space<vmem>>, %arg6: memref<1x512xf32, #tpu.memory_space<vmem>>, %arg7: memref<1x16x384xf32, #tpu.memory_space<vmem>>, %arg8: memref<8x512xf32, #tpu.memory_space<vmem>>, %arg9: memref<72x512xf32, #tpu.memory_space<vmem>>, %arg10: memref<72x384xf32, #tpu.memory_space<vmem>>) attributes {dimension_semantics = [#tpu.dimension_semantics<parallel>], iteration_bounds = array<i64: 2>, scalar_prefetch = 0 : i64, scratch_operands = 3 : i64, tpu.core_type = #tpu.core_type<tc>, window_params = [{transform_indices = @transform_0, window_bounds = array<i64: 1, 8, 640>}, {pipeline_mode = #tpu.pipeline_mode<synchronous>, transform_indices = @transform_1, window_bounds = array<i64: 8, 72>}, {pipeline_mode = #tpu.pipeline_mode<synchronous>, transform_indices = @transform_2, window_bounds = array<i64: 8, 1>}, {pipeline_mode = #tpu.pipeline_mode<synchronous>, transform_indices = @transform_3, window_bounds = array<i64: 16, 72>}, {pipeline_mode = #tpu.pipeline_mode<synchronous>, transform_indices = @transform_4, window_bounds = array<i64: 16, 1>}, {pipeline_mode = #tpu.pipeline_mode<synchronous>, transform_indices = @transform_5, window_bounds = array<i64: 1, 512>}, {transform_indices = @transform_6, window_bounds = array<i64: 1, 16, 384>}]} {
    %c0 = arith.constant 0 : index
    %c0_0 = arith.constant 0 : index
    %c0_1 = arith.constant 0 : index
    %0 = vector.load %arg1[%c0, %c0_0, %c0_1] : memref<1x8x640xf32, #tpu.memory_space<vmem>>, vector<1x8x512xf32>
    %1 = vector.shape_cast %0 : vector<1x8x512xf32> to vector<8x512xf32>
    %c0_2 = arith.constant 0 : index
    %c0_3 = arith.constant 0 : index
    %2 = vector.load %arg9[%c0_2, %c0_3] : memref<72x512xf32, #tpu.memory_space<vmem>>, vector<8x512xf32>
    tpu.vector_store %arg9[%c0_2, %c0_3], %1 {strides = array<i32>} : memref<72x512xf32, #tpu.memory_space<vmem>>, vector<8x512xf32>,
    %c0_4 = arith.constant 0 : index
    %c0_5 = arith.constant 0 : index
    %c1 = arith.constant 1 : index
    %3 = vector.load %arg1[%c0_4, %c0_5, %c1] : memref<1x8x640xf32, #tpu.memory_space<vmem>>, vector<1x8x512xf32>
    %4 = vector.shape_cast %3 : vector<1x8x512xf32> to vector<8x512xf32>
    %c8 = arith.constant 8 : index
    %c0_6 = arith.constant 0 : index
    %5 = vector.load %arg9[%c8, %c0_6] : memref<72x512xf32, #tpu.memory_space<vmem>>, vector<8x512xf32>
    tpu.vector_store %arg9[%c8, %c0_6], %4 {strides = array<i32>} : memref<72x512xf32, #tpu.memory_space<vmem>>, vector<8x512xf32>,
    %c0_7 = arith.constant 0 : index
    %c0_8 = arith.constant 0 : index
    %c2 = arith.constant 2 : index
    %6 = vector.load %arg1[%c0_7, %c0_8, %c2] : memref<1x8x640xf32, #tpu.memory_space<vmem>>, vector<1x8x512xf32>
    %7 = vector.shape_cast %6 : vector<1x8x512xf32> to vector<8x512xf32>
    %c16 = arith.constant 16 : index
    %c0_9 = arith.constant 0 : index
    %8 = vector.load %arg9[%c16, %c0_9] : memref<72x512xf32, #tpu.memory_space<vmem>>, vector<8x512xf32>
    tpu.vector_store %arg9[%c16, %c0_9], %7 {strides = array<i32>} : memref<72x512xf32, #tpu.memory_space<vmem>>, vector<8x512xf32>,
    %c0_10 = arith.constant 0 : index
    %c0_11 = arith.constant 0 : index
    %c18 = arith.constant 18 : index
    %9 = vector.load %arg1[%c0_10, %c0_11, %c18] : memref<1x8x640xf32, #tpu.memory_space<vmem>>, vector<1x8x512xf32>
    %10 = vector.shape_cast %9 : vector<1x8x512xf32> to vector<8x512xf32>
    %c24 = arith.constant 24 : index
    %c0_12 = arith.constant 0 : index
    %11 = vector.load %arg9[%c24, %c0_12] : memref<72x512xf32, #tpu.memory_space<vmem>>, vector<8x512xf32>
    tpu.vector_store %arg9[%c24, %c0_12], %10 {strides = array<i32>} : memref<72x512xf32, #tpu.memory_space<vmem>>, vector<8x512xf32>,
    %c0_13 = arith.constant 0 : index
    %c0_14 = arith.constant 0 : index
    %c19 = arith.constant 19 : index
    %12 = vector.load %arg1[%c0_13, %c0_14, %c19] : memref<1x8x640xf32, #tpu.memory_space<vmem>>, vector<1x8x512xf32>
    %13 = vector.shape_cast %12 : vector<1x8x512xf32> to vector<8x512xf32>
    %c32 = arith.constant 32 : index
    %c0_15 = arith.constant 0 : index
    %14 = vector.load %arg9[%c32, %c0_15] : memref<72x512xf32, #tpu.memory_space<vmem>>, vector<8x512xf32>
    tpu.vector_store %arg9[%c32, %c0_15], %13 {strides = array<i32>} : memref<72x512xf32, #tpu.memory_space<vmem>>, vector<8x512xf32>,
    %c0_16 = arith.constant 0 : index
    %c0_17 = arith.constant 0 : index
    %c20 = arith.constant 20 : index
    %15 = vector.load %arg1[%c0_16, %c0_17, %c20] : memref<1x8x640xf32, #tpu.memory_space<vmem>>, vector<1x8x512xf32>
    %16 = vector.shape_cast %15 : vector<1x8x512xf32> to vector<8x512xf32>
    %c40 = arith.constant 40 : index
    %c0_18 = arith.constant 0 : index
    %17 = vector.load %arg9[%c40, %c0_18] : memref<72x512xf32, #tpu.memory_space<vmem>>, vector<8x512xf32>
    tpu.vector_store %arg9[%c40, %c0_18], %16 {strides = array<i32>} : memref<72x512xf32, #tpu.memory_space<vmem>>, vector<8x512xf32>,
    %c0_19 = arith.constant 0 : index
    %c0_20 = arith.constant 0 : index
    %c36 = arith.constant 36 : index
    %18 = vector.load %arg1[%c0_19, %c0_20, %c36] : memref<1x8x640xf32, #tpu.memory_space<vmem>>, vector<1x8x512xf32>
    %19 = vector.shape_cast %18 : vector<1x8x512xf32> to vector<8x512xf32>
    %c48 = arith.constant 48 : index
    %c0_21 = arith.constant 0 : index
    %20 = vector.load %arg9[%c48, %c0_21] : memref<72x512xf32, #tpu.memory_space<vmem>>, vector<8x512xf32>
    tpu.vector_store %arg9[%c48, %c0_21], %19 {strides = array<i32>} : memref<72x512xf32, #tpu.memory_space<vmem>>, vector<8x512xf32>,
    %c0_22 = arith.constant 0 : index
    %c0_23 = arith.constant 0 : index
    %c37 = arith.constant 37 : index
    %21 = vector.load %arg1[%c0_22, %c0_23, %c37] : memref<1x8x640xf32, #tpu.memory_space<vmem>>, vector<1x8x512xf32>
    %22 = vector.shape_cast %21 : vector<1x8x512xf32> to vector<8x512xf32>
    %c56 = arith.constant 56 : index
    %c0_24 = arith.constant 0 : index
    %23 = vector.load %arg9[%c56, %c0_24] : memref<72x512xf32, #tpu.memory_space<vmem>>, vector<8x512xf32>
    tpu.vector_store %arg9[%c56, %c0_24], %22 {strides = array<i32>} : memref<72x512xf32, #tpu.memory_space<vmem>>, vector<8x512xf32>,
    %c0_25 = arith.constant 0 : index
    %c0_26 = arith.constant 0 : index
    %c38 = arith.constant 38 : index
    %24 = vector.load %arg1[%c0_25, %c0_26, %c38] : memref<1x8x640xf32, #tpu.memory_space<vmem>>, vector<1x8x512xf32>
    %25 = vector.shape_cast %24 : vector<1x8x512xf32> to vector<8x512xf32>
    %c64 = arith.constant 64 : index
    %c0_27 = arith.constant 0 : index
    %26 = vector.load %arg9[%c64, %c0_27] : memref<72x512xf32, #tpu.memory_space<vmem>>, vector<8x512xf32>
    tpu.vector_store %arg9[%c64, %c0_27], %25 {strides = array<i32>} : memref<72x512xf32, #tpu.memory_space<vmem>>, vector<8x512xf32>,
    %c0_28 = arith.constant 0 : index
    %c0_29 = arith.constant 0 : index
    %27 = vector.load %arg2[%c0_28, %c0_29] : memref<8x72xf32, #tpu.memory_space<vmem>>, vector<8x72xf32>
    %c0_30 = arith.constant 0 : index
    %c0_31 = arith.constant 0 : index
    %28 = vector.load %arg9[%c0_30, %c0_31] : memref<72x512xf32, #tpu.memory_space<vmem>>, vector<72x512xf32>
    %cst = arith.constant dense<0.000000e+00> : vector<8x512xf32>
    %29 = tpu.matmul %27, %28, %cst {dimension_numbers = #tpu.dot_dimension_numbers<[1], [0], [0], [1], [0, 0, 1, 1], [], []>} : vector<8x72xf32>, vector<72x512xf32>, vector<8x512xf32> -> vector<8x512xf32>
    %c0_32 = arith.constant 0 : index
    %c0_33 = arith.constant 0 : index
    %30 = vector.load %arg3[%c0_32, %c0_33] : memref<8x1xf32, #tpu.memory_space<vmem>>, vector<8x1xf32>
    %31 = vector.broadcast %30 : vector<8x1xf32> to vector<8x512xf32>
    %32 = arith.addf %29, %31 : vector<8x512xf32>
    %cst_34 = arith.constant 0.000000e+00 : f32
    %33 = vector.broadcast %cst_34 : f32 to vector<8x512xf32>
    %34 = arith.maximumf %32, %33 : vector<8x512xf32>
    %c0_35 = arith.constant 0 : index
    %c0_36 = arith.constant 0 : index
    %35 = vector.load %arg6[%c0_35, %c0_36] : memref<1x512xf32, #tpu.memory_space<vmem>>, vector<1x512xf32>
    %36 = vector.broadcast %35 : vector<1x512xf32> to vector<8x512xf32>
    %37 = arith.mulf %34, %36 : vector<8x512xf32>
    %c0_37 = arith.constant 0 : index
    %c0_38 = arith.constant 0 : index
    %38 = vector.load %arg8[%c0_37, %c0_38] : memref<8x512xf32, #tpu.memory_space<vmem>>, vector<8x512xf32>
    tpu.vector_store %arg8[%c0_37, %c0_38], %37 {strides = array<i32>} : memref<8x512xf32, #tpu.memory_space<vmem>>, vector<8x512xf32>,
    %c0_39 = arith.constant 0 : index
    %c0_40 = arith.constant 0 : index
    %39 = vector.load %arg8[%c0_39, %c0_40] : memref<8x512xf32, #tpu.memory_space<vmem>>, vector<8x384xf32>
    %c0_41 = arith.constant 0 : index
    %c0_42 = arith.constant 0 : index
    %40 = vector.load %arg10[%c0_41, %c0_42] : memref<72x384xf32, #tpu.memory_space<vmem>>, vector<8x384xf32>
    tpu.vector_store %arg10[%c0_41, %c0_42], %39 {strides = array<i32>} : memref<72x384xf32, #tpu.memory_space<vmem>>, vector<8x384xf32>,
    %c0_43 = arith.constant 0 : index
    %c1_44 = arith.constant 1 : index
    %41 = vector.load %arg8[%c0_43, %c1_44] : memref<8x512xf32, #tpu.memory_space<vmem>>, vector<8x384xf32>
    %c8_45 = arith.constant 8 : index
    %c0_46 = arith.constant 0 : index
    %42 = vector.load %arg10[%c8_45, %c0_46] : memref<72x384xf32, #tpu.memory_space<vmem>>, vector<8x384xf32>
    tpu.vector_store %arg10[%c8_45, %c0_46], %41 {strides = array<i32>} : memref<72x384xf32, #tpu.memory_space<vmem>>, vector<8x384xf32>,
    %c0_47 = arith.constant 0 : index
    %c2_48 = arith.constant 2 : index
    %43 = vector.load %arg8[%c0_47, %c2_48] : memref<8x512xf32, #tpu.memory_space<vmem>>, vector<8x384xf32>
    %c16_49 = arith.constant 16 : index
    %c0_50 = arith.constant 0 : index
    %44 = vector.load %arg10[%c16_49, %c0_50] : memref<72x384xf32, #tpu.memory_space<vmem>>, vector<8x384xf32>
    tpu.vector_store %arg10[%c16_49, %c0_50], %43 {strides = array<i32>} : memref<72x384xf32, #tpu.memory_space<vmem>>, vector<8x384xf32>,
    %c0_51 = arith.constant 0 : index
    %c18_52 = arith.constant 18 : index
    %45 = vector.load %arg8[%c0_51, %c18_52] : memref<8x512xf32, #tpu.memory_space<vmem>>, vector<8x384xf32>
    %c24_53 = arith.constant 24 : index
    %c0_54 = arith.constant 0 : index
    %46 = vector.load %arg10[%c24_53, %c0_54] : memref<72x384xf32, #tpu.memory_space<vmem>>, vector<8x384xf32>
    tpu.vector_store %arg10[%c24_53, %c0_54], %45 {strides = array<i32>} : memref<72x384xf32, #tpu.memory_space<vmem>>, vector<8x384xf32>,
    %c0_55 = arith.constant 0 : index
    %c19_56 = arith.constant 19 : index
    %47 = vector.load %arg8[%c0_55, %c19_56] : memref<8x512xf32, #tpu.memory_space<vmem>>, vector<8x384xf32>
    %c32_57 = arith.constant 32 : index
    %c0_58 = arith.constant 0 : index
    %48 = vector.load %arg10[%c32_57, %c0_58] : memref<72x384xf32, #tpu.memory_space<vmem>>, vector<8x384xf32>
    tpu.vector_store %arg10[%c32_57, %c0_58], %47 {strides = array<i32>} : memref<72x384xf32, #tpu.memory_space<vmem>>, vector<8x384xf32>,
    %c0_59 = arith.constant 0 : index
    %c20_60 = arith.constant 20 : index
    %49 = vector.load %arg8[%c0_59, %c20_60] : memref<8x512xf32, #tpu.memory_space<vmem>>, vector<8x384xf32>
    %c40_61 = arith.constant 40 : index
    %c0_62 = arith.constant 0 : index
    %50 = vector.load %arg10[%c40_61, %c0_62] : memref<72x384xf32, #tpu.memory_space<vmem>>, vector<8x384xf32>
    tpu.vector_store %arg10[%c40_61, %c0_62], %49 {strides = array<i32>} : memref<72x384xf32, #tpu.memory_space<vmem>>, vector<8x384xf32>,
    %c0_63 = arith.constant 0 : index
    %c36_64 = arith.constant 36 : index
    %51 = vector.load %arg8[%c0_63, %c36_64] : memref<8x512xf32, #tpu.memory_space<vmem>>, vector<8x384xf32>
    %c48_65 = arith.constant 48 : index
    %c0_66 = arith.constant 0 : index
    %52 = vector.load %arg10[%c48_65, %c0_66] : memref<72x384xf32, #tpu.memory_space<vmem>>, vector<8x384xf32>
    tpu.vector_store %arg10[%c48_65, %c0_66], %51 {strides = array<i32>} : memref<72x384xf32, #tpu.memory_space<vmem>>, vector<8x384xf32>,
    %c0_67 = arith.constant 0 : index
    %c37_68 = arith.constant 37 : index
    %53 = vector.load %arg8[%c0_67, %c37_68] : memref<8x512xf32, #tpu.memory_space<vmem>>, vector<8x384xf32>
    %c56_69 = arith.constant 56 : index
    %c0_70 = arith.constant 0 : index
    %54 = vector.load %arg10[%c56_69, %c0_70] : memref<72x384xf32, #tpu.memory_space<vmem>>, vector<8x384xf32>
    tpu.vector_store %arg10[%c56_69, %c0_70], %53 {strides = array<i32>} : memref<72x384xf32, #tpu.memory_space<vmem>>, vector<8x384xf32>,
    %c0_71 = arith.constant 0 : index
    %c38_72 = arith.constant 38 : index
    %55 = vector.load %arg8[%c0_71, %c38_72] : memref<8x512xf32, #tpu.memory_space<vmem>>, vector<8x384xf32>
    %c64_73 = arith.constant 64 : index
    %c0_74 = arith.constant 0 : index
    %56 = vector.load %arg10[%c64_73, %c0_74] : memref<72x384xf32, #tpu.memory_space<vmem>>, vector<8x384xf32>
    tpu.vector_store %arg10[%c64_73, %c0_74], %55 {strides = array<i32>} : memref<72x384xf32, #tpu.memory_space<vmem>>, vector<8x384xf32>,
    %c0_75 = arith.constant 0 : index
    %c0_76 = arith.constant 0 : index
    %57 = vector.load %arg4[%c0_75, %c0_76] : memref<16x72xf32, #tpu.memory_space<vmem>>, vector<16x72xf32>
    %c0_77 = arith.constant 0 : index
    %c0_78 = arith.constant 0 : index
    %58 = vector.load %arg10[%c0_77, %c0_78] : memref<72x384xf32, #tpu.memory_space<vmem>>, vector<72x384xf32>
    %cst_79 = arith.constant dense<0.000000e+00> : vector<16x384xf32>
    %59 = tpu.matmul %57, %58, %cst_79 {dimension_numbers = #tpu.dot_dimension_numbers<[1], [0], [0], [1], [0, 0, 1, 1], [], []>} : vector<16x72xf32>, vector<72x384xf32>, vector<16x384xf32> -> vector<16x384xf32>
    %c0_80 = arith.constant 0 : index
    %c0_81 = arith.constant 0 : index
    %60 = vector.load %arg5[%c0_80, %c0_81] : memref<16x1xf32, #tpu.memory_space<vmem>>, vector<16x1xf32>
    %61 = vector.broadcast %60 : vector<16x1xf32> to vector<16x384xf32>
    %62 = arith.addf %59, %61 : vector<16x384xf32>
    %cst_82 = arith.constant 0.000000e+00 : f32
    %63 = vector.broadcast %cst_82 : f32 to vector<16x384xf32>
    %64 = arith.maximumf %62, %63 : vector<16x384xf32>
    %c0_83 = arith.constant 0 : index
    %c0_84 = arith.constant 0 : index
    %c0_85 = arith.constant 0 : index
    %65 = vector.load %arg7[%c0_83, %c0_84, %c0_85] : memref<1x16x384xf32, #tpu.memory_space<vmem>>, vector<1x16x384xf32>
    %66 = vector.shape_cast %65 : vector<1x16x384xf32> to vector<16x384xf32>
    %67 = vector.shape_cast %64 : vector<16x384xf32> to vector<1x16x384xf32>
    tpu.vector_store %arg7[%c0_83, %c0_84, %c0_85], %67 {strides = array<i32>} : memref<1x16x384xf32, #tpu.memory_space<vmem>>, vector<1x16x384xf32>,
    return
  }
  func.func @transform_0(%arg0: i32) -> (i32, i32, i32) {
    %c0_i32 = arith.constant 0 : i32
    %c0_i32_0 = arith.constant 0 : i32
    %c0_i32_1 = arith.constant 0 : i32
    return %arg0, %c0_i32, %c0_i32_0 : i32, i32, i32
  }
  func.func @transform_1(%arg0: i32) -> (i32, i32) {
    %c0_i32 = arith.constant 0 : i32
    %c0_i32_0 = arith.constant 0 : i32
    %c0_i32_1 = arith.constant 0 : i32
    return %c0_i32, %c0_i32_0 : i32, i32
  }
  func.func @transform_2(%arg0: i32) -> (i32, i32) {
    %c0_i32 = arith.constant 0 : i32
    %c0_i32_0 = arith.constant 0 : i32
    %c0_i32_1 = arith.constant 0 : i32
    return %c0_i32, %c0_i32_0 : i32, i32
  }
  func.func @transform_3(%arg0: i32) -> (i32, i32) {
    %c0_i32 = arith.constant 0 : i32
    %c0_i32_0 = arith.constant 0 : i32
    %c0_i32_1 = arith.constant 0 : i32
    return %c0_i32, %c0_i32_0 : i32, i32
  }
  func.func @transform_4(%arg0: i32) -> (i32, i32) {
    %c0_i32 = arith.constant 0 : i32
    %c0_i32_0 = arith.constant 0 : i32
    %c0_i32_1 = arith.constant 0 : i32
    return %c0_i32, %c0_i32_0 : i32, i32
  }
  func.func @transform_5(%arg0: i32) -> (i32, i32) {
    %c0_i32 = arith.constant 0 : i32
    %c0_i32_0 = arith.constant 0 : i32
    %c0_i32_1 = arith.constant 0 : i32
    return %c0_i32, %c0_i32_0 : i32, i32
  }
  func.func @transform_6(%arg0: i32) -> (i32, i32, i32) {
    %c0_i32 = arith.constant 0 : i32
    %c0_i32_0 = arith.constant 0 : i32
    %c0_i32_1 = arith.constant 0 : i32
    return %arg0, %c0_i32, %c0_i32_0 : i32, i32, i32
  }
}

</mosaic_0001>

<llo_original>
// kernel: decoder_block_forward.1
$region0: #{decoder_block_forward.1}
  #allocation0 [shape = 'u32[]', space=smem, size = 0x4, offset = 0x4, fixed_abs, tag = 'smem constant byte address 0x4 - core index']
  #allocation1 [shape = 'u32[144,128]{1,0:T(1,128)}', space=vmem, size = 0x12000, scoped, tag = 'internal scratch']
  #allocation2 [shape = 'f32[8,512]{1,0:T(8,128)}', space=vmem, size = 0x4000, scoped, tag = 'scratch operand']
  #allocation3 [shape = 'f32[72,512]{1,0:T(8,128)}', space=vmem, size = 0x24000, scoped, tag = 'scratch operand']
  #allocation4 [shape = 'f32[72,384]{1,0:T(8,128)}', space=vmem, size = 0x1b000, scoped, tag = 'scratch operand']
  %s0 = inlined_call_operand.vmem [shape: f32[2,8,640], index: 0, kind: input, shape index: {}]
  %s1 = inlined_call_operand.vmem [shape: f32[8,72], index: 1, kind: input, shape index: {}]
  %s2 = inlined_call_operand.vmem [shape: f32[8,1], index: 2, kind: input, shape index: {}]
  %s3 = inlined_call_operand.vmem [shape: f32[16,72], index: 3, kind: input, shape index: {}]
  %s4 = inlined_call_operand.vmem [shape: f32[16,1], index: 4, kind: input, shape index: {}]
  %s5 = inlined_call_operand.vmem [shape: f32[1,512], index: 5, kind: input, shape index: {}]
  %s6 = inlined_call_operand.vmem [shape: f32[2,16,384], index: 6, kind: output, shape index: {}]
  %s7 = sld [smem:[#allocation0]]
  $region57: #{decoder_block_forward.1} parent=0
    _
  %s9 = ssub.s32 1, %s7
  %s10 = scalar_select 0, %s9, %s7
  loop: start=0, step=1, limit=4
  $region2: #{decoder_block_forward.1} parent=0 // loop_pre_header
    _
  $region3: #{decoder_block_forward.1} parent=0 // loop_header
    %s12 = sphi 0, %s16
    %p13 = scmp.ge.s32.totalorder %s12, 4
    %s22 = sphi 0, %s24
    %s25 = sphi 0, %s22
    %s26 = sphi 0, %s25
    %s42 = sphi 0, %s26
    %s46 = sphi 0, %s46
    %s48 = sphi 0, %s46
    %s49 = sphi 0, %s48
    %s63 = sphi 0, %s49
    %s67 = sphi 0, %s67
    %s69 = sphi 0, %s67
    %s70 = sphi 0, %s69
    %s84 = sphi 0, %s70
    %s88 = sphi 0, %s88
    %s90 = sphi 0, %s88
    %s91 = sphi 0, %s90
    %s105 = sphi 0, %s91
    %s109 = sphi 0, %s109
    %s111 = sphi 0, %s109
    %s112 = sphi 0, %s111
    %s126 = sphi 0, %s112
    %s130 = sphi 0, %s130
    %s132 = sphi 0, %s130
    %s133 = sphi 0, %s132
    %s147 = sphi 0, %s133
    %s153 = sphi 0, %s155
    %s156 = sphi 0, %s153
    %s157 = sphi 0, %s156
    %s173 = sphi 0, %s157
  $region4: #{decoder_block_forward.1} parent=0 // loop_header_branch
    %15 = sbr.rel (%p13) target = $region8
  $region5: #{decoder_block_forward.1} parent=0 // loop_body
    %s17 = ssub.s32 %s12, 1
    %s18 = ssub.s32 %s12, 2
    %s19 = sadd.s32 %s12, 1
    %s20 = ssub.s32 %s12, %s19
    %p21 = scmp.eq.s32.totalorder %s20, 0
    %s23 = sadd.s32 %s22, 1
    %s24 = scalar_select %p21, %s22, %s23
    %p27 = pneg %p21
    %p28 = scmp.eq.s32.totalorder %s12, 1
    %p29 = por %p27, %p28
    %p30 = scmp.ne.s32.totalorder %s22, %s25
    %p31 = scmp.eq.s32.totalorder %s12, 0
    %p32 = por %p30, %p31
    %p33 = scmp.ne.s32.totalorder %s22, %s25
    %p34 = scmp.eq.s32.totalorder %s17, 1
    %p35 = por %p33, %p34
    %p36 = scmp.ne.s32.totalorder %s25, %s26
    %p37 = scmp.eq.s32.totalorder %s17, 0
    %p38 = por %p36, %p37
    %p39 = scmp.ne.s32.totalorder %s25, %s26
    %p40 = scmp.eq.s32.totalorder %s18, 1
    %p41 = por %p39, %p40
    %p43 = scmp.ne.s32.totalorder %s26, %s42
    %p44 = scmp.eq.s32.totalorder %s18, 0
    %p45 = por %p43, %p44
    %s47 = sadd.s32 %s46, 1
    %p50 = scmp.eq.s32.totalorder %s12, 1
    %p51 = scmp.ne.s32.totalorder %s46, %s48
    %p52 = scmp.eq.s32.totalorder %s12, 0
    %p53 = por %p51, %p52
    %p54 = scmp.ne.s32.totalorder %s46, %s48
    %p55 = scmp.eq.s32.totalorder %s17, 1
    %p56 = por %p54, %p55
    %p57 = scmp.ne.s32.totalorder %s48, %s49
    %p58 = scmp.eq.s32.totalorder %s17, 0
    %p59 = por %p57, %p58
    %p60 = scmp.ne.s32.totalorder %s48, %s49
    %p61 = scmp.eq.s32.totalorder %s18, 1
    %p62 = por %p60, %p61
    %p64 = scmp.ne.s32.totalorder %s49, %s63
    %p65 = scmp.eq.s32.totalorder %s18, 0
    %p66 = por %p64, %p65
    %s68 = sadd.s32 %s67, 1
    %p71 = scmp.eq.s32.totalorder %s12, 1
    %p72 = scmp.ne.s32.totalorder %s67, %s69
    %p73 = scmp.eq.s32.totalorder %s12, 0
    %p74 = por %p72, %p73
    %p75 = scmp.ne.s32.totalorder %s67, %s69
    %p76 = scmp.eq.s32.totalorder %s17, 1
    %p77 = por %p75, %p76
    %p78 = scmp.ne.s32.totalorder %s69, %s70
    %p79 = scmp.eq.s32.totalorder %s17, 0
    %p80 = por %p78, %p79
    %p81 = scmp.ne.s32.totalorder %s69, %s70
    %p82 = scmp.eq.s32.totalorder %s18, 1
    %p83 = por %p81, %p82
    %p85 = scmp.ne.s32.totalorder %s70, %s84
    %p86 = scmp.eq.s32.totalorder %s18, 0
    %p87 = por %p85, %p86
    %s89 = sadd.s32 %s88, 1
    %p92 = scmp.eq.s32.totalorder %s12, 1
    %p93 = scmp.ne.s32.totalorder %s88, %s90
    %p94 = scmp.eq.s32.totalorder %s12, 0
    %p95 = por %p93, %p94
    %p96 = scmp.ne.s32.totalorder %s88, %s90
    %p97 = scmp.eq.s32.totalorder %s17, 1
    %p98 = por %p96, %p97
    %p99 = scmp.ne.s32.totalorder %s90, %s91
    %p100 = scmp.eq.s32.totalorder %s17, 0
    %p101 = por %p99, %p100
    %p102 = scmp.ne.s32.totalorder %s90, %s91
    %p103 = scmp.eq.s32.totalorder %s18, 1
    %p104 = por %p102, %p103
    %p106 = scmp.ne.s32.totalorder %s91, %s105
    %p107 = scmp.eq.s32.totalorder %s18, 0
    %p108 = por %p106, %p107
    %s110 = sadd.s32 %s109, 1
    %p113 = scmp.eq.s32.totalorder %s12, 1
    %p114 = scmp.ne.s32.totalorder %s109, %s111
    %p115 = scmp.eq.s32.totalorder %s12, 0
    %p116 = por %p114, %p115
    %p117 = scmp.ne.s32.totalorder %s109, %s111
    %p118 = scmp.eq.s32.totalorder %s17, 1
    %p119 = por %p117, %p118
    %p120 = scmp.ne.s32.totalorder %s111, %s112
    %p121 = scmp.eq.s32.totalorder %s17, 0
    %p122 = por %p120, %p121
    %p123 = scmp.ne.s32.totalorder %s111, %s112
    %p124 = scmp.eq.s32.totalorder %s18, 1
    %p125 = por %p123, %p124
    %p127 = scmp.ne.s32.totalorder %s112, %s126
    %p128 = scmp.eq.s32.totalorder %s18, 0
    %p129 = por %p127, %p128
    %s131 = sadd.s32 %s130, 1
    %p134 = scmp.eq.s32.totalorder %s12, 1
    %p135 = scmp.ne.s32.totalorder %s130, %s132
    %p136 = scmp.eq.s32.totalorder %s12, 0
    %p137 = por %p135, %p136
    %p138 = scmp.ne.s32.totalorder %s130, %s132
    %p139 = scmp.eq.s32.totalorder %s17, 1
    %p140 = por %p138, %p139
    %p141 = scmp.ne.s32.totalorder %s132, %s133
    %p142 = scmp.eq.s32.totalorder %s17, 0
    %p143 = por %p141, %p142
    %p144 = scmp.ne.s32.totalorder %s132, %s133
    %p145 = scmp.eq.s32.totalorder %s18, 1
    %p146 = por %p144, %p145
    %p148 = scmp.ne.s32.totalorder %s133, %s147
    %p149 = scmp.eq.s32.totalorder %s18, 0
    %p150 = por %p148, %p149
    %s151 = ssub.s32 %s12, %s19
    %p152 = scmp.eq.s32.totalorder %s151, 0
    %s154 = sadd.s32 %s153, 1
    %s155 = scalar_select %p152, %s153, %s154
    %p158 = pneg %p152
    %p159 = scmp.eq.s32.totalorder %s12, 1
    %p160 = por %p158, %p159
    %p161 = scmp.ne.s32.totalorder %s153, %s156
    %p162 = scmp.eq.s32.totalorder %s12, 0
    %p163 = por %p161, %p162
    %p164 = scmp.ne.s32.totalorder %s153, %s156
    %p165 = scmp.eq.s32.totalorder %s17, 1
    %p166 = por %p164, %p165
    %p167 = scmp.ne.s32.totalorder %s156, %s157
    %p168 = scmp.eq.s32.totalorder %s17, 0
    %p169 = por %p167, %p168
    %p170 = scmp.ne.s32.totalorder %s156, %s157
    %p171 = scmp.eq.s32.totalorder %s18, 1
    %p172 = por %p170, %p171
    %p174 = scmp.ne.s32.totalorder %s157, %s173
    %p175 = scmp.eq.s32.totalorder %s18, 0
    %p176 = por %p174, %p175
    %p177 = scmp.le.s32.totalorder 1, %s12
    %p178 = scmp.lt.s32.totalorder %s12, 3
    %p179 = pnand %p177, %p178
    %p180 = pneg %p179
    // Predicated region
    $region9: #{decoder_block_forward.1} parent=5 // pred_check
      _
    $region10: #{decoder_block_forward.1} parent=5 // pred_check_branch
      %182 = sbr.rel (%p179) target = $region12
    $region11: #{decoder_block_forward.1} parent=5 // pred_region
      %s183 = ssub.s32 %s12, 1
      // Predicated region
      $region13: #{decoder_block_forward.1} parent=11 // pred_check
        %p184 = pneg %p59
      $region14: #{decoder_block_forward.1} parent=11 // pred_check_branch
        %186 = sbr.rel (%p184) target = $region16
      $region15: #{decoder_block_forward.1} parent=11 // pred_region
        _
      $region16: #{decoder_block_forward.1} parent=11 // pred_fallthru
        _
      // Predicated region
      $region17: #{decoder_block_forward.1} parent=11 // pred_check
        %p187 = pneg %p80
      $region18: #{decoder_block_forward.1} parent=11 // pred_check_branch
        %189 = sbr.rel (%p187) target = $region20
      $region19: #{decoder_block_forward.1} parent=11 // pred_region
        _
      $region20: #{decoder_block_forward.1} parent=11 // pred_fallthru
        _
      // Predicated region
      $region21: #{decoder_block_forward.1} parent=11 // pred_check
        %p190 = pneg %p101
      $region22: #{decoder_block_forward.1} parent=11 // pred_check_branch
        %192 = sbr.rel (%p190) target = $region24
      $region23: #{decoder_block_forward.1} parent=11 // pred_region
        _
      $region24: #{decoder_block_forward.1} parent=11 // pred_fallthru
        _
      // Predicated region
      $region25: #{decoder_block_forward.1} parent=11 // pred_check
        %p193 = pneg %p122
      $region26: #{decoder_block_forward.1} parent=11 // pred_check_branch
        %195 = sbr.rel (%p193) target = $region28
      $region27: #{decoder_block_forward.1} parent=11 // pred_region
        _
      $region28: #{decoder_block_forward.1} parent=11 // pred_fallthru
        _
      // Predicated region
      $region29: #{decoder_block_forward.1} parent=11 // pred_check
        %p196 = pneg %p143
      $region30: #{decoder_block_forward.1} parent=11 // pred_check_branch
        %198 = sbr.rel (%p196) target = $region32
      $region31: #{decoder_block_forward.1} parent=11 // pred_region
        _
      $region32: #{decoder_block_forward.1} parent=11 // pred_fallthru
        _
    $region12: #{decoder_block_forward.1} parent=5 // pred_fallthru
      _
    %p199 = scmp.lt.s32.totalorder %s12, 2
    // Predicated region
    $region33: #{decoder_block_forward.1} parent=5 // pred_check
      %p200 = pneg %p199
    $region34: #{decoder_block_forward.1} parent=5 // pred_check_branch
      %202 = sbr.rel (%p200) target = $region36
    $region35: #{decoder_block_forward.1} parent=5 // pred_region
      // Predicated region
      $region37: #{decoder_block_forward.1} parent=35 // pred_check
        %p203 = pneg %p32
      $region38: #{decoder_block_forward.1} parent=35 // pred_check_branch
        %205 = sbr.rel (%p203) target = $region40
      $region39: #{decoder_block_forward.1} parent=35 // pred_region
        %p206 = scmp.lt.s32.totalorder %s12, 1
        %s207 = scalar_select %p206, %s12, 1
        %s208 = smul.addr %s207, 5
        %s209 = smul.addr %s208, 8
        %s210 = scalar_lea.vmem %s0, %s209
      $region40: #{decoder_block_forward.1} parent=35 // pred_fallthru
        _
    $region36: #{decoder_block_forward.1} parent=5 // pred_fallthru
      _
    %p211 = scmp.le.s32.totalorder 1, %s12
    %p212 = scmp.lt.s32.totalorder %s12, 3
    %p213 = pnand %p211, %p212
    %p214 = pneg %p213
    // Predicated region
    $region41: #{decoder_block_forward.1} parent=5 // pred_check
      _
    $region42: #{decoder_block_forward.1} parent=5 // pred_check_branch
      %216 = sbr.rel (%p213) target = $region44
    $region43: #{decoder_block_forward.1} parent=5 // pred_region
      %s217 = ssub.s32 %s12, 1
      %p218 = scmp.lt.s32.totalorder %s17, 1
      %s219 = scalar_select %p218, %s17, 1
      %s220 = smul.addr %s219, 5
      %s221 = smul.addr %s220, 8
      %s222 = scalar_lea.vmem %s0, %s221
      %p223 = pneg %p38
      %p224 = pneg %p35
      %p225 = pneg %p59
      %p226 = pneg %p56
      %p227 = pneg %p80
      %p228 = pneg %p77
      %p229 = pneg %p101
      %p230 = pneg %p98
      %p231 = pneg %p122
      %p232 = pneg %p119
      %p233 = pneg %p143
      %p234 = pneg %p140
      %p235 = pneg %p169
      %p236 = pneg %p166
      %p237 = scmp.lt.s32.totalorder %s17, 1
      %s238 = scalar_select %p237, %s17, 1
      %s239 = smul.addr %s238, 6
      %s240 = smul.addr %s239, 8
      %s241 = scalar_lea.vmem %s6, %s240
      %p242 = scmp.lt.s32.totalorder %s17, 1
      %s243 = scalar_select %p242, %s17, 1
      %s244 = smul.addr %s243, 5
      %s245 = smul.addr %s244, 8
      %s246 = scalar_lea.vmem %s0, %s245
      %p247 = scmp.lt.s32.totalorder %s17, 1
      %s248 = scalar_select %p247, %s17, 1
      %s249 = smul.addr %s248, 6
      %s250 = smul.addr %s249, 8
      %s251 = scalar_lea.vmem %s6, %s250
      %v252 = vld [vmem:[%s246] sm:$0xff]
      %v253 = vld [vmem:[%s246 + $0x8] sm:$0xff]
      %v254 = vld [vmem:[%s246 + $0x10] sm:$0xff]
      %v255 = vld [vmem:[%s246 + $0x18] sm:$0xff]
      %256 = vst [vmem:[#allocation3] sm:$0xff] %v252
      %257 = vst [vmem:[#allocation3 + $0x8] sm:$0xff] %v253
      %258 = vst [vmem:[#allocation3 + $0x10] sm:$0xff] %v254
      %259 = vst [vmem:[#allocation3 + $0x18] sm:$0xff] %v255
      %v260 = vld [vmem:[%s246] sm:$0xff]
      %v261 = vld [vmem:[%s246 + $0x8] sm:$0xff]
      %v262 = vld [vmem:[%s246 + $0x10] sm:$0xff]
      %v263 = vld [vmem:[%s246 + $0x18] sm:$0xff]
      %v264 = vld [vmem:[%s246 + $0x20] sm:$0xff]
      %270 = vrot.lane.b32.xlu0 %v260, 127
      %v271 = vpop.permute.xlu0 %270
      %272 = vrot.lane.b32.xlu0 %v261, 127
      %v273 = vpop.permute.xlu0 %272
      %274 = vrot.lane.b32.xlu0 %v262, 127
      %v275 = vpop.permute.xlu0 %274
      %276 = vrot.lane.b32.xlu0 %v263, 127
      %v277 = vpop.permute.xlu0 %276
      %278 = vrot.lane.b32.xlu0 %v264, 127
      %v279 = vpop.permute.xlu0 %278
      %vm280 = vcmask 1039360
      %v281 = vsel %vm280, %v271, %v273
      %v282 = vsel %vm280, %v273, %v275
      %v283 = vsel %vm280, %v275, %v277
      %v284 = vsel %vm280, %v277, %v279
      %289 = vst [vmem:[#allocation3 + $0x20] sm:$0xff] %v281
      %290 = vst [vmem:[#allocation3 + $0x28] sm:$0xff] %v282
      %291 = vst [vmem:[#allocation3 + $0x30] sm:$0xff] %v283
      %292 = vst [vmem:[#allocation3 + $0x38] sm:$0xff] %v284
      %v293 = vld [vmem:[%s246] sm:$0xff]
      %v294 = vld [vmem:[%s246 + $0x8] sm:$0xff]
      %v295 = vld [vmem:[%s246 + $0x10] sm:$0xff]
      %v296 = vld [vmem:[%s246 + $0x18] sm:$0xff]
      %v297 = vld [vmem:[%s246 + $0x20] sm:$0xff]
      %303 = vrot.lane.b32.xlu0 %v293, 126
      %v304 = vpop.permute.xlu0 %303
      %305 = vrot.lane.b32.xlu0 %v294, 126
      %v306 = vpop.permute.xlu0 %305
      %307 = vrot.lane.b32.xlu0 %v295, 126
      %v308 = vpop.permute.xlu0 %307
      %309 = vrot.lane.b32.xlu0 %v296, 126
      %v310 = vpop.permute.xlu0 %309
      %311 = vrot.lane.b32.xlu0 %v297, 126
      %v312 = vpop.permute.xlu0 %311
      %vm313 = vcmask 1031168
      %v314 = vsel %vm313, %v304, %v306
      %v315 = vsel %vm313, %v306, %v308
      %v316 = vsel %vm313, %v308, %v310
      %v317 = vsel %vm313, %v310, %v312
      %322 = vst [vmem:[#allocation3 + $0x40] sm:$0xff] %v314
      %323 = vst [vmem:[#allocation3 + $0x48] sm:$0xff] %v315
      %324 = vst [vmem:[#allocation3 + $0x50] sm:$0xff] %v316
      %325 = vst [vmem:[#allocation3 + $0x58] sm:$0xff] %v317
      %v326 = vld [vmem:[%s246] sm:$0xff]
      %v327 = vld [vmem:[%s246 + $0x8] sm:$0xff]
      %v328 = vld [vmem:[%s246 + $0x10] sm:$0xff]
      %v329 = vld [vmem:[%s246 + $0x18] sm:$0xff]
      %v330 = vld [vmem:[%s246 + $0x20] sm:$0xff]
      %336 = vrot.lane.b32.xlu0 %v326, 110
      %v337 = vpop.permute.xlu0 %336
      %338 = vrot.lane.b32.xlu0 %v327, 110
      %v339 = vpop.permute.xlu0 %338
      %340 = vrot.lane.b32.xlu0 %v328, 110
      %v341 = vpop.permute.xlu0 %340
      %342 = vrot.lane.b32.xlu0 %v329, 110
      %v343 = vpop.permute.xlu0 %342
      %344 = vrot.lane.b32.xlu0 %v330, 110
      %v345 = vpop.permute.xlu0 %344
      %vm346 = vcmask 900096
      %v347 = vsel %vm346, %v337, %v339
      %v348 = vsel %vm346, %v339, %v341
      %v349 = vsel %vm346, %v341, %v343
      %v350 = vsel %vm346, %v343, %v345
      %355 = vst [vmem:[#allocation3 + $0x60] sm:$0xff] %v347
      %356 = vst [vmem:[#allocation3 + $0x68] sm:$0xff] %v348
      %357 = vst [vmem:[#allocation3 + $0x70] sm:$0xff] %v349
      %358 = vst [vmem:[#allocation3 + $0x78] sm:$0xff] %v350
      %v359 = vld [vmem:[%s246] sm:$0xff]
      %v360 = vld [vmem:[%s246 + $0x8] sm:$0xff]
      %v361 = vld [vmem:[%s246 + $0x10] sm:$0xff]
      %v362 = vld [vmem:[%s246 + $0x18] sm:$0xff]
      %v363 = vld [vmem:[%s246 + $0x20] sm:$0xff]
      %369 = vrot.lane.b32.xlu0 %v359, 109
      %v370 = vpop.permute.xlu0 %369
      %371 = vrot.lane.b32.xlu0 %v360, 109
      %v372 = vpop.permute.xlu0 %371
      %373 = vrot.lane.b32.xlu0 %v361, 109
      %v374 = vpop.permute.xlu0 %373
      %375 = vrot.lane.b32.xlu0 %v362, 109
      %v376 = vpop.permute.xlu0 %375
      %377 = vrot.lane.b32.xlu0 %v363, 109
      %v378 = vpop.permute.xlu0 %377
      %vm379 = vcmask 891904
      %v380 = vsel %vm379, %v370, %v372
      %v381 = vsel %vm379, %v372, %v374
      %v382 = vsel %vm379, %v374, %v376
      %v383 = vsel %vm379, %v376, %v378
      %388 = vst [vmem:[#allocation3 + $0x80] sm:$0xff] %v380
      %389 = vst [vmem:[#allocation3 + $0x88] sm:$0xff] %v381
      %390 = vst [vmem:[#allocation3 + $0x90] sm:$0xff] %v382
      %391 = vst [vmem:[#allocation3 + $0x98] sm:$0xff] %v383
      %v392 = vld [vmem:[%s246] sm:$0xff]
      %v393 = vld [vmem:[%s246 + $0x8] sm:$0xff]
      %v394 = vld [vmem:[%s246 + $0x10] sm:$0xff]
      %v395 = vld [vmem:[%s246 + $0x18] sm:$0xff]
      %v396 = vld [vmem:[%s246 + $0x20] sm:$0xff]
      %402 = vrot.lane.b32.xlu0 %v392, 108
      %v403 = vpop.permute.xlu0 %402
      %404 = vrot.lane.b32.xlu0 %v393, 108
      %v405 = vpop.permute.xlu0 %404
      %406 = vrot.lane.b32.xlu0 %v394, 108
      %v407 = vpop.permute.xlu0 %406
      %408 = vrot.lane.b32.xlu0 %v395, 108
      %v409 = vpop.permute.xlu0 %408
      %410 = vrot.lane.b32.xlu0 %v396, 108
      %v411 = vpop.permute.xlu0 %410
      %vm412 = vcmask 883712
      %v413 = vsel %vm412, %v403, %v405
      %v414 = vsel %vm412, %v405, %v407
      %v415 = vsel %vm412, %v407, %v409
      %v416 = vsel %vm412, %v409, %v411
      %421 = vst [vmem:[#allocation3 + $0xa0] sm:$0xff] %v413
      %422 = vst [vmem:[#allocation3 + $0xa8] sm:$0xff] %v414
      %423 = vst [vmem:[#allocation3 + $0xb0] sm:$0xff] %v415
      %424 = vst [vmem:[#allocation3 + $0xb8] sm:$0xff] %v416
      %v425 = vld [vmem:[%s246] sm:$0xff]
      %v426 = vld [vmem:[%s246 + $0x8] sm:$0xff]
      %v427 = vld [vmem:[%s246 + $0x10] sm:$0xff]
      %v428 = vld [vmem:[%s246 + $0x18] sm:$0xff]
      %v429 = vld [vmem:[%s246 + $0x20] sm:$0xff]
      %435 = vrot.lane.b32.xlu0 %v425, 92
      %v436 = vpop.permute.xlu0 %435
      %437 = vrot.lane.b32.xlu0 %v426, 92
      %v438 = vpop.permute.xlu0 %437
      %439 = vrot.lane.b32.xlu0 %v427, 92
      %v440 = vpop.permute.xlu0 %439
      %441 = vrot.lane.b32.xlu0 %v428, 92
      %v442 = vpop.permute.xlu0 %441
      %443 = vrot.lane.b32.xlu0 %v429, 92
      %v444 = vpop.permute.xlu0 %443
      %vm445 = vcmask 752640
      %v446 = vsel %vm445, %v436, %v438
      %v447 = vsel %vm445, %v438, %v440
      %v448 = vsel %vm445, %v440, %v442
      %v449 = vsel %vm445, %v442, %v444
      %454 = vst [vmem:[#allocation3 + $0xc0] sm:$0xff] %v446
      %455 = vst [vmem:[#allocation3 + $0xc8] sm:$0xff] %v447
      %456 = vst [vmem:[#allocation3 + $0xd0] sm:$0xff] %v448
      %457 = vst [vmem:[#allocation3 + $0xd8] sm:$0xff] %v449
      %v458 = vld [vmem:[%s246] sm:$0xff]
      %v459 = vld [vmem:[%s246 + $0x8] sm:$0xff]
      %v460 = vld [vmem:[%s246 + $0x10] sm:$0xff]
      %v461 = vld [vmem:[%s246 + $0x18] sm:$0xff]
      %v462 = vld [vmem:[%s246 + $0x20] sm:$0xff]
      %468 = vrot.lane.b32.xlu0 %v458, 91
      %v469 = vpop.permute.xlu0 %468
      %470 = vrot.lane.b32.xlu0 %v459, 91
      %v471 = vpop.permute.xlu0 %470
      %472 = vrot.lane.b32.xlu0 %v460, 91
      %v473 = vpop.permute.xlu0 %472
      %474 = vrot.lane.b32.xlu0 %v461, 91
      %v475 = vpop.permute.xlu0 %474
      %476 = vrot.lane.b32.xlu0 %v462, 91
      %v477 = vpop.permute.xlu0 %476
      %vm478 = vcmask 744448
      %v479 = vsel %vm478, %v469, %v471
      %v480 = vsel %vm478, %v471, %v473
      %v481 = vsel %vm478, %v473, %v475
      %v482 = vsel %vm478, %v475, %v477
      %487 = vst [vmem:[#allocation3 + $0xe0] sm:$0xff] %v479
      %488 = vst [vmem:[#allocation3 + $0xe8] sm:$0xff] %v480
      %489 = vst [vmem:[#allocation3 + $0xf0] sm:$0xff] %v481
      %490 = vst [vmem:[#allocation3 + $0xf8] sm:$0xff] %v482
      %v491 = vld [vmem:[%s246] sm:$0xff]
      %v492 = vld [vmem:[%s246 + $0x8] sm:$0xff]
      %v493 = vld [vmem:[%s246 + $0x10] sm:$0xff]
      %v494 = vld [vmem:[%s246 + $0x18] sm:$0xff]
      %v495 = vld [vmem:[%s246 + $0x20] sm:$0xff]
      %501 = vrot.lane.b32.xlu0 %v491, 90
      %v502 = vpop.permute.xlu0 %501
      %503 = vrot.lane.b32.xlu0 %v492, 90
      %v504 = vpop.permute.xlu0 %503
      %505 = vrot.lane.b32.xlu0 %v493, 90
      %v506 = vpop.permute.xlu0 %505
      %507 = vrot.lane.b32.xlu0 %v494, 90
      %v508 = vpop.permute.xlu0 %507
      %509 = vrot.lane.b32.xlu0 %v495, 90
      %v510 = vpop.permute.xlu0 %509
      %vm511 = vcmask 736256
      %v512 = vsel %vm511, %v502, %v504
      %v513 = vsel %vm511, %v504, %v506
      %v514 = vsel %vm511, %v506, %v508
      %v515 = vsel %vm511, %v508, %v510
      %520 = vst [vmem:[#allocation3 + $0x100] sm:$0xff] %v512
      %521 = vst [vmem:[#allocation3 + $0x108] sm:$0xff] %v513
      %522 = vst [vmem:[#allocation3 + $0x110] sm:$0xff] %v514
      %523 = vst [vmem:[#allocation3 + $0x118] sm:$0xff] %v515
      %v524 = vld [vmem:[%s1] sm:$0xff]
      %v525 = vld [vmem:[#allocation3] sm:$0xff]
      %v526 = vld [vmem:[#allocation3 + $0x8] sm:$0xff]
      %v527 = vld [vmem:[#allocation3 + $0x10] sm:$0xff]
      %v528 = vld [vmem:[#allocation3 + $0x18] sm:$0xff]
      %v529 = vld [vmem:[#allocation3 + $0x20] sm:$0xff]
      %v530 = vld [vmem:[#allocation3 + $0x28] sm:$0xff]
      %v531 = vld [vmem:[#allocation3 + $0x30] sm:$0xff]
      %v532 = vld [vmem:[#allocation3 + $0x38] sm:$0xff]
      %v533 = vld [vmem:[#allocation3 + $0x40] sm:$0xff]
      %v534 = vld [vmem:[#allocation3 + $0x48] sm:$0xff]
      %v535 = vld [vmem:[#allocation3 + $0x50] sm:$0xff]
      %v536 = vld [vmem:[#allocation3 + $0x58] sm:$0xff]
      %v537 = vld [vmem:[#allocation3 + $0x60] sm:$0xff]
      %v538 = vld [vmem:[#allocation3 + $0x68] sm:$0xff]
      %v539 = vld [vmem:[#allocation3 + $0x70] sm:$0xff]
      %v540 = vld [vmem:[#allocation3 + $0x78] sm:$0xff]
      %v541 = vld [vmem:[#allocation3 + $0x80] sm:$0xff]
      %v542 = vld [vmem:[#allocation3 + $0x88] sm:$0xff]
      %v543 = vld [vmem:[#allocation3 + $0x90] sm:$0xff]
      %v544 = vld [vmem:[#allocation3 + $0x98] sm:$0xff]
      %v545 = vld [vmem:[#allocation3 + $0xa0] sm:$0xff]
      %v546 = vld [vmem:[#allocation3 + $0xa8] sm:$0xff]
      %v547 = vld [vmem:[#allocation3 + $0xb0] sm:$0xff]
      %v548 = vld [vmem:[#allocation3 + $0xb8] sm:$0xff]
      %v549 = vld [vmem:[#allocation3 + $0xc0] sm:$0xff]
      %v550 = vld [vmem:[#allocation3 + $0xc8] sm:$0xff]
      %v551 = vld [vmem:[#allocation3 + $0xd0] sm:$0xff]
      %v552 = vld [vmem:[#allocation3 + $0xd8] sm:$0xff]
      %v553 = vld [vmem:[#allocation3 + $0xe0] sm:$0xff]
      %v554 = vld [vmem:[#allocation3 + $0xe8] sm:$0xff]
      %v555 = vld [vmem:[#allocation3 + $0xf0] sm:$0xff]
      %v556 = vld [vmem:[#allocation3 + $0xf8] sm:$0xff]
      %v557 = vld [vmem:[#allocation3 + $0x100] sm:$0xff]
      %v558 = vld [vmem:[#allocation3 + $0x108] sm:$0xff]
      %v559 = vld [vmem:[#allocation3 + $0x110] sm:$0xff]
      %v560 = vld [vmem:[#allocation3 + $0x118] sm:$0xff]
      %v561 = vld [vmem:[%s2] sm:$0xff]
      %563 = vset.pattern.permute.xlu0 0
      %564 = vperm.xlu0 %563, %v561
      %v565 = vpop.permute.xlu0 %564
      %vm567 = vcmask 588800
      %v569 = vsel %vm567, %v524, 0
      %571 = vmatprep.subr.mxu0 %v526
      %572 = vmatpush1.msra.mxu0 %v525
      %573 = vmatprep.subr.mxu0 %v530
      %574 = vmatpush1.msra.mxu0 %v529
      %575 = vmatprep.subr.mxu0 %v534
      %576 = vmatpush1.msra.mxu0 %v533
      %577 = vmatprep.subr.mxu0 %v538
      %578 = vmatpush1.msra.mxu0 %v537
      %579 = vmatprep.subr.mxu0 %v542
      %580 = vmatpush1.msra.mxu0 %v541
      %581 = vmatprep.subr.mxu0 %v546
      %582 = vmatpush1.msra.mxu0 %v545
      %583 = vmatprep.subr.mxu0 %v550
      %584 = vmatpush1.msra.mxu0 %v549
      %585 = vmatprep.subr.mxu0 %v554
      %586 = vmatpush1.msra.mxu0 %v553
      %587 = vmatprep.subr.mxu0 %v558
      %588 = vmatpush1.msra.mxu0 %v557
      %589 = vmatprep.subr.mxu0 0.0
      %590 = vmatpush1.msra.mxu0 0.0
      %591 = vmatprep.subr.mxu0 0.0
      %592 = vmatpush1.msra.mxu0 0.0
      %593 = vmatprep.subr.mxu0 0.0
      %594 = vmatpush1.msra.mxu0 0.0
      %595 = vmatprep.subr.mxu0 0.0
      %596 = vmatpush1.msra.mxu0 0.0
      %597 = vmatprep.subr.mxu0 0.0
      %598 = vmatpush1.msra.mxu0 0.0
      %599 = vmatprep.subr.mxu0 0.0
      %600 = vmatpush1.msra.mxu0 0.0
      %601 = vmatprep.subr.mxu0 0.0
      %602 = vmatpush1.msra.mxu0 0.0
      %603 = vmatprep.subr.mxu0 0.0
      %604 = vmatpush1.msra.mxu0 0.0
      %605 = vmatprep.subr.mxu0 0.0
      %606 = vmatpush1.msra.mxu0 0.0
      %607 = vmatprep.subr.mxu0 0.0
      %608 = vmatpush1.msra.mxu0 0.0
      %609 = vmatprep.subr.mxu0 0.0
      %610 = vmatpush1.msra.mxu0 0.0
      %611 = vmatprep.subr.mxu0 0.0
      %612 = vmatpush1.msra.mxu0 0.0
      %613 = vmatprep.subr.mxu0 0.0
      %614 = vmatpush1.msra.mxu0 0.0
      %615 = vmatprep.subr.mxu0 0.0
      %616 = vmatpush1.msra.mxu0 0.0
      %617 = vmatprep.subr.mxu0 0.0
      %618 = vmatpush1.msra.mxu0 0.0
      %619 = vmatprep.subr.mxu0 0.0
      %620 = vmatpush1.msra.mxu0 0.0
      %621 = vmatprep.subr.mxu0 0.0
      %622 = vmatpush1.msra.mxu0 0.0
      %623 = vmatprep.subr.mxu0 0.0
      %624 = vmatpush1.msra.mxu0 0.0
      %625 = vmatprep.subr.mxu0 0.0
      %626 = vmatpush1.msra.mxu0 0.0
      %627 = vmatprep.subr.mxu0 0.0
      %628 = vmatpush1.msra.mxu0 0.0
      %629 = vmatprep.subr.mxu0 0.0
      %630 = vmatpush1.msra.mxu0 0.0
      %631 = vmatprep.subr.mxu0 0.0
      %632 = vmatpush1.msra.mxu0 0.0
      %633 = vmatprep.subr.mxu0 0.0
      %634 = vmatpush1.msra.mxu0 0.0
      %635 = vmatprep.mubr.f32.mxu0 0.0
      %636 = vmatmul.mubr.f32.gmra.mrb[0].mxu0 %v569
      %v637 = vpop.f32.mrb[0].mxu0
      %v638 = vadd.f32 %v565, %v637
      %v639 = vpop.f32.mrb[0].mxu0
      %v640 = vadd.f32 %v565, %v639
      %641 = vdwg.mxu0
      %642 = vmatprep.subr.mxu0 %v528
      %643 = vmatpush1.msra.mxu0 %v527
      %644 = vmatprep.subr.mxu0 %v532
      %645 = vmatpush1.msra.mxu0 %v531
      %646 = vmatprep.subr.mxu0 %v536
      %647 = vmatpush1.msra.mxu0 %v535
      %648 = vmatprep.subr.mxu0 %v540
      %649 = vmatpush1.msra.mxu0 %v539
      %650 = vmatprep.subr.mxu0 %v544
      %651 = vmatpush1.msra.mxu0 %v543
      %652 = vmatprep.subr.mxu0 %v548
      %653 = vmatpush1.msra.mxu0 %v547
      %654 = vmatprep.subr.mxu0 %v552
      %655 = vmatpush1.msra.mxu0 %v551
      %656 = vmatprep.subr.mxu0 %v556
      %657 = vmatpush1.msra.mxu0 %v555
      %658 = vmatprep.subr.mxu0 %v560
      %659 = vmatpush1.msra.mxu0 %v559
      %660 = vmatprep.subr.mxu0 0.0
      %661 = vmatpush1.msra.mxu0 0.0
      %662 = vmatprep.subr.mxu0 0.0
      %663 = vmatpush1.msra.mxu0 0.0
      %664 = vmatprep.subr.mxu0 0.0
      %665 = vmatpush1.msra.mxu0 0.0
      %666 = vmatprep.subr.mxu0 0.0
      %667 = vmatpush1.msra.mxu0 0.0
      %668 = vmatprep.subr.mxu0 0.0
      %669 = vmatpush1.msra.mxu0 0.0
      %670 = vmatprep.subr.mxu0 0.0
      %671 = vmatpush1.msra.mxu0 0.0
      %672 = vmatprep.subr.mxu0 0.0
      %673 = vmatpush1.msra.mxu0 0.0
      %674 = vmatprep.subr.mxu0 0.0
      %675 = vmatpush1.msra.mxu0 0.0
      %676 = vmatprep.subr.mxu0 0.0
      %677 = vmatpush1.msra.mxu0 0.0
      %678 = vmatprep.subr.mxu0 0.0
      %679 = vmatpush1.msra.mxu0 0.0
      %680 = vmatprep.subr.mxu0 0.0
      %681 = vmatpush1.msra.mxu0 0.0
      %682 = vmatprep.subr.mxu0 0.0
      %683 = vmatpush1.msra.mxu0 0.0
      %684 = vmatprep.subr.mxu0 0.0
      %685 = vmatpush1.msra.mxu0 0.0
      %686 = vmatprep.subr.mxu0 0.0
      %687 = vmatpush1.msra.mxu0 0.0
      %688 = vmatprep.subr.mxu0 0.0
      %689 = vmatpush1.msra.mxu0 0.0
      %690 = vmatprep.subr.mxu0 0.0
      %691 = vmatpush1.msra.mxu0 0.0
      %692 = vmatprep.subr.mxu0 0.0
      %693 = vmatpush1.msra.mxu0 0.0
      %694 = vmatprep.subr.mxu0 0.0
      %695 = vmatpush1.msra.mxu0 0.0
      %696 = vmatprep.subr.mxu0 0.0
      %697 = vmatpush1.msra.mxu0 0.0
      %698 = vmatprep.subr.mxu0 0.0
      %699 = vmatpush1.msra.mxu0 0.0
      %700 = vmatprep.subr.mxu0 0.0
      %701 = vmatpush1.msra.mxu0 0.0
      %702 = vmatprep.subr.mxu0 0.0
      %703 = vmatpush1.msra.mxu0 0.0
      %704 = vmatprep.subr.mxu0 0.0
      %705 = vmatpush1.msra.mxu0 0.0
      %706 = vmatprep.mubr.f32.mxu0 0.0
      %707 = vmatmul.mubr.f32.gmra.mrb[0].mxu0 %v569
      %v708 = vpop.f32.mrb[0].mxu0
      %v709 = vadd.f32 %v565, %v708
      %v710 = vpop.f32.mrb[0].mxu0
      %v711 = vadd.f32 %v565, %v710
      %712 = vdwg.mxu0
      %v713 = vmax.f32 %v638, 0.0
      %v714 = vmax.f32 %v640, 0.0
      %v715 = vmax.f32 %v709, 0.0
      %v716 = vmax.f32 %v711, 0.0
      %v717 = vld [vmem:[%s5] sm:$0xf]
      %v719 = vlaneseq
      %v720 = vshrl.u32 %v719, 7
      %v721 = vsub.s32 0, %v720
      %v722 = vrot.slane %v717, %v721
      %v723 = vlaneseq
      %v724 = vshrl.u32 %v723, 7
      %v725 = vsub.s32 1, %v724
      %v726 = vrot.slane %v717, %v725
      %v727 = vlaneseq
      %v728 = vshrl.u32 %v727, 7
      %v729 = vsub.s32 2, %v728
      %v730 = vrot.slane %v717, %v729
      %v731 = vlaneseq
      %v732 = vshrl.u32 %v731, 7
      %v733 = vsub.s32 3, %v732
      %v734 = vrot.slane %v717, %v733
      %v739 = vmul.f32 %v713, %v722
      %v740 = vmul.f32 %v714, %v726
      %v741 = vmul.f32 %v715, %v730
      %v742 = vmul.f32 %v716, %v734
      %743 = vst [vmem:[#allocation2] sm:$0xff] %v739
      %744 = vst [vmem:[#allocation2 + $0x8] sm:$0xff] %v740
      %745 = vst [vmem:[#allocation2 + $0x10] sm:$0xff] %v741
      %746 = vst [vmem:[#allocation2 + $0x18] sm:$0xff] %v742
      %v747 = vld [vmem:[#allocation2] sm:$0xff]
      %v748 = vld [vmem:[#allocation2 + $0x8] sm:$0xff]
      %v749 = vld [vmem:[#allocation2 + $0x10] sm:$0xff]
      %750 = vst [vmem:[#allocation4] sm:$0xff] %v747
      %751 = vst [vmem:[#allocation4 + $0x8] sm:$0xff] %v748
      %752 = vst [vmem:[#allocation4 + $0x10] sm:$0xff] %v749
      %v753 = vld [vmem:[#allocation2] sm:$0xff]
      %v754 = vld [vmem:[#allocation2 + $0x8] sm:$0xff]
      %v755 = vld [vmem:[#allocation2 + $0x10] sm:$0xff]
      %v756 = vld [vmem:[#allocation2 + $0x18] sm:$0xff]
      %761 = vrot.lane.b32.xlu0 %v753, 127
      %v762 = vpop.permute.xlu0 %761
      %763 = vrot.lane.b32.xlu0 %v754, 127
      %v764 = vpop.permute.xlu0 %763
      %765 = vrot.lane.b32.xlu0 %v755, 127
      %v766 = vpop.permute.xlu0 %765
      %767 = vrot.lane.b32.xlu0 %v756, 127
      %v768 = vpop.permute.xlu0 %767
      %v769 = vsel %vm280, %v762, %v764
      %v770 = vsel %vm280, %v764, %v766
      %v771 = vsel %vm280, %v766, %v768
      %775 = vst [vmem:[#allocation4 + $0x18] sm:$0xff] %v769
      %776 = vst [vmem:[#allocation4 + $0x20] sm:$0xff] %v770
      %777 = vst [vmem:[#allocation4 + $0x28] sm:$0xff] %v771
      %v778 = vld [vmem:[#allocation2] sm:$0xff]
      %v779 = vld [vmem:[#allocation2 + $0x8] sm:$0xff]
      %v780 = vld [vmem:[#allocation2 + $0x10] sm:$0xff]
      %v781 = vld [vmem:[#allocation2 + $0x18] sm:$0xff]
      %786 = vrot.lane.b32.xlu0 %v778, 126
      %v787 = vpop.permute.xlu0 %786
      %788 = vrot.lane.b32.xlu0 %v779, 126
      %v789 = vpop.permute.xlu0 %788
      %790 = vrot.lane.b32.xlu0 %v780, 126
      %v791 = vpop.permute.xlu0 %790
      %792 = vrot.lane.b32.xlu0 %v781, 126
      %v793 = vpop.permute.xlu0 %792
      %v794 = vsel %vm313, %v787, %v789
      %v795 = vsel %vm313, %v789, %v791
      %v796 = vsel %vm313, %v791, %v793
      %800 = vst [vmem:[#allocation4 + $0x30] sm:$0xff] %v794
      %801 = vst [vmem:[#allocation4 + $0x38] sm:$0xff] %v795
      %802 = vst [vmem:[#allocation4 + $0x40] sm:$0xff] %v796
      %v803 = vld [vmem:[#allocation2] sm:$0xff]
      %v804 = vld [vmem:[#allocation2 + $0x8] sm:$0xff]
      %v805 = vld [vmem:[#allocation2 + $0x10] sm:$0xff]
      %v806 = vld [vmem:[#allocation2 + $0x18] sm:$0xff]
      %811 = vrot.lane.b32.xlu0 %v803, 110
      %v812 = vpop.permute.xlu0 %811
      %813 = vrot.lane.b32.xlu0 %v804, 110
      %v814 = vpop.permute.xlu0 %813
      %815 = vrot.lane.b32.xlu0 %v805, 110
      %v816 = vpop.permute.xlu0 %815
      %817 = vrot.lane.b32.xlu0 %v806, 110
      %v818 = vpop.permute.xlu0 %817
      %v819 = vsel %vm346, %v812, %v814
      %v820 = vsel %vm346, %v814, %v816
      %v821 = vsel %vm346, %v816, %v818
      %825 = vst [vmem:[#allocation4 + $0x48] sm:$0xff] %v819
      %826 = vst [vmem:[#allocation4 + $0x50] sm:$0xff] %v820
      %827 = vst [vmem:[#allocation4 + $0x58] sm:$0xff] %v821
      %v828 = vld [vmem:[#allocation2] sm:$0xff]
      %v829 = vld [vmem:[#allocation2 + $0x8] sm:$0xff]
      %v830 = vld [vmem:[#allocation2 + $0x10] sm:$0xff]
      %v831 = vld [vmem:[#allocation2 + $0x18] sm:$0xff]
      %836 = vrot.lane.b32.xlu0 %v828, 109
      %v837 = vpop.permute.xlu0 %836
      %838 = vrot.lane.b32.xlu0 %v829, 109
      %v839 = vpop.permute.xlu0 %838
      %840 = vrot.lane.b32.xlu0 %v830, 109
      %v841 = vpop.permute.xlu0 %840
      %842 = vrot.lane.b32.xlu0 %v831, 109
      %v843 = vpop.permute.xlu0 %842
      %v844 = vsel %vm379, %v837, %v839
      %v845 = vsel %vm379, %v839, %v841
      %v846 = vsel %vm379, %v841, %v843
      %850 = vst [vmem:[#allocation4 + $0x60] sm:$0xff] %v844
      %851 = vst [vmem:[#allocation4 + $0x68] sm:$0xff] %v845
      %852 = vst [vmem:[#allocation4 + $0x70] sm:$0xff] %v846
      %v853 = vld [vmem:[#allocation2] sm:$0xff]
      %v854 = vld [vmem:[#allocation2 + $0x8] sm:$0xff]
      %v855 = vld [vmem:[#allocation2 + $0x10] sm:$0xff]
      %v856 = vld [vmem:[#allocation2 + $0x18] sm:$0xff]
      %861 = vrot.lane.b32.xlu0 %v853, 108
      %v862 = vpop.permute.xlu0 %861
      %863 = vrot.lane.b32.xlu0 %v854, 108
      %v864 = vpop.permute.xlu0 %863
      %865 = vrot.lane.b32.xlu0 %v855, 108
      %v866 = vpop.permute.xlu0 %865
      %867 = vrot.lane.b32.xlu0 %v856, 108
      %v868 = vpop.permute.xlu0 %867
      %v869 = vsel %vm412, %v862, %v864
      %v870 = vsel %vm412, %v864, %v866
      %v871 = vsel %vm412, %v866, %v868
      %875 = vst [vmem:[#allocation4 + $0x78] sm:$0xff] %v869
      %876 = vst [vmem:[#allocation4 + $0x80] sm:$0xff] %v870
      %877 = vst [vmem:[#allocation4 + $0x88] sm:$0xff] %v871
      %v878 = vld [vmem:[#allocation2] sm:$0xff]
      %v879 = vld [vmem:[#allocation2 + $0x8] sm:$0xff]
      %v880 = vld [vmem:[#allocation2 + $0x10] sm:$0xff]
      %v881 = vld [vmem:[#allocation2 + $0x18] sm:$0xff]
      %886 = vrot.lane.b32.xlu0 %v878, 92
      %v887 = vpop.permute.xlu0 %886
      %888 = vrot.lane.b32.xlu0 %v879, 92
      %v889 = vpop.permute.xlu0 %888
      %890 = vrot.lane.b32.xlu0 %v880, 92
      %v891 = vpop.permute.xlu0 %890
      %892 = vrot.lane.b32.xlu0 %v881, 92
      %v893 = vpop.permute.xlu0 %892
      %v894 = vsel %vm445, %v887, %v889
      %v895 = vsel %vm445, %v889, %v891
      %v896 = vsel %vm445, %v891, %v893
      %900 = vst [vmem:[#allocation4 + $0x90] sm:$0xff] %v894
      %901 = vst [vmem:[#allocation4 + $0x98] sm:$0xff] %v895
      %902 = vst [vmem:[#allocation4 + $0xa0] sm:$0xff] %v896
      %v903 = vld [vmem:[#allocation2] sm:$0xff]
      %v904 = vld [vmem:[#allocation2 + $0x8] sm:$0xff]
      %v905 = vld [vmem:[#allocation2 + $0x10] sm:$0xff]
      %v906 = vld [vmem:[#allocation2 + $0x18] sm:$0xff]
      %911 = vrot.lane.b32.xlu0 %v903, 91
      %v912 = vpop.permute.xlu0 %911
      %913 = vrot.lane.b32.xlu0 %v904, 91
      %v914 = vpop.permute.xlu0 %913
      %915 = vrot.lane.b32.xlu0 %v905, 91
      %v916 = vpop.permute.xlu0 %915
      %917 = vrot.lane.b32.xlu0 %v906, 91
      %v918 = vpop.permute.xlu0 %917
      %v919 = vsel %vm478, %v912, %v914
      %v920 = vsel %vm478, %v914, %v916
      %v921 = vsel %vm478, %v916, %v918
      %925 = vst [vmem:[#allocation4 + $0xa8] sm:$0xff] %v919
      %926 = vst [vmem:[#allocation4 + $0xb0] sm:$0xff] %v920
      %927 = vst [vmem:[#allocation4 + $0xb8] sm:$0xff] %v921
      %v928 = vld [vmem:[#allocation2] sm:$0xff]
      %v929 = vld [vmem:[#allocation2 + $0x8] sm:$0xff]
      %v930 = vld [vmem:[#allocation2 + $0x10] sm:$0xff]
      %v931 = vld [vmem:[#allocation2 + $0x18] sm:$0xff]
      %936 = vrot.lane.b32.xlu0 %v928, 90
      %v937 = vpop.permute.xlu0 %936
      %938 = vrot.lane.b32.xlu0 %v929, 90
      %v939 = vpop.permute.xlu0 %938
      %940 = vrot.lane.b32.xlu0 %v930, 90
      %v941 = vpop.permute.xlu0 %940
      %942 = vrot.lane.b32.xlu0 %v931, 90
      %v943 = vpop.permute.xlu0 %942
      %v944 = vsel %vm511, %v937, %v939
      %v945 = vsel %vm511, %v939, %v941
      %v946 = vsel %vm511, %v941, %v943
      %950 = vst [vmem:[#allocation4 + $0xc0] sm:$0xff] %v944
      %951 = vst [vmem:[#allocation4 + $0xc8] sm:$0xff] %v945
      %952 = vst [vmem:[#allocation4 + $0xd0] sm:$0xff] %v946
      %v953 = vld [vmem:[%s3] sm:$0xff]
      %v954 = vld [vmem:[%s3 + $0x8] sm:$0xff]
      %v955 = vld [vmem:[#allocation4] sm:$0xff]
      %v956 = vld [vmem:[#allocation4 + $0x8] sm:$0xff]
      %v957 = vld [vmem:[#allocation4 + $0x10] sm:$0xff]
      %v958 = vld [vmem:[#allocation4 + $0x18] sm:$0xff]
      %v959 = vld [vmem:[#allocation4 + $0x20] sm:$0xff]
      %v960 = vld [vmem:[#allocation4 + $0x28] sm:$0xff]
      %v961 = vld [vmem:[#allocation4 + $0x30] sm:$0xff]
      %v962 = vld [vmem:[#allocation4 + $0x38] sm:$0xff]
      %v963 = vld [vmem:[#allocation4 + $0x40] sm:$0xff]
      %v964 = vld [vmem:[#allocation4 + $0x48] sm:$0xff]
      %v965 = vld [vmem:[#allocation4 + $0x50] sm:$0xff]
      %v966 = vld [vmem:[#allocation4 + $0x58] sm:$0xff]
      %v967 = vld [vmem:[#allocation4 + $0x60] sm:$0xff]
      %v968 = vld [vmem:[#allocation4 + $0x68] sm:$0xff]
      %v969 = vld [vmem:[#allocation4 + $0x70] sm:$0xff]
      %v970 = vld [vmem:[#allocation4 + $0x78] sm:$0xff]
      %v971 = vld [vmem:[#allocation4 + $0x80] sm:$0xff]
      %v972 = vld [vmem:[#allocation4 + $0x88] sm:$0xff]
      %v973 = vld [vmem:[#allocation4 + $0x90] sm:$0xff]
      %v974 = vld [vmem:[#allocation4 + $0x98] sm:$0xff]
      %v975 = vld [vmem:[#allocation4 + $0xa0] sm:$0xff]
      %v976 = vld [vmem:[#allocation4 + $0xa8] sm:$0xff]
      %v977 = vld [vmem:[#allocation4 + $0xb0] sm:$0xff]
      %v978 = vld [vmem:[#allocation4 + $0xb8] sm:$0xff]
      %v979 = vld [vmem:[#allocation4 + $0xc0] sm:$0xff]
      %v980 = vld [vmem:[#allocation4 + $0xc8] sm:$0xff]
      %v981 = vld [vmem:[#allocation4 + $0xd0] sm:$0xff]
      %v982 = vld [vmem:[%s4] sm:$0xff]
      %v983 = vld [vmem:[%s4 + $0x8] sm:$0xff]
      %985 = vset.pattern.permute.xlu0 0
      %986 = vperm.xlu0 %985, %v982
      %v987 = vpop.permute.xlu0 %986
      %990 = vset.pattern.permute.xlu0 0
      %991 = vperm.xlu0 %990, %v983
      %v992 = vpop.permute.xlu0 %991
      %v995 = vsel %vm567, %v953, 0
      %v998 = vsel %vm567, %v954, 0
      %1000 = vmatprep.subr.mxu0 %v956
      %1001 = vmatpush1.msra.mxu0 %v955
      %1002 = vmatprep.subr.mxu0 %v959
      %1003 = vmatpush1.msra.mxu0 %v958
      %1004 = vmatprep.subr.mxu0 %v962
      %1005 = vmatpush1.msra.mxu0 %v961
      %1006 = vmatprep.subr.mxu0 %v965
      %1007 = vmatpush1.msra.mxu0 %v964
      %1008 = vmatprep.subr.mxu0 %v968
      %1009 = vmatpush1.msra.mxu0 %v967
      %1010 = vmatprep.subr.mxu0 %v971
      %1011 = vmatpush1.msra.mxu0 %v970
      %1012 = vmatprep.subr.mxu0 %v974
      %1013 = vmatpush1.msra.mxu0 %v973
      %1014 = vmatprep.subr.mxu0 %v977
      %1015 = vmatpush1.msra.mxu0 %v976
      %1016 = vmatprep.subr.mxu0 %v980
      %1017 = vmatpush1.msra.mxu0 %v979
      %1018 = vmatprep.subr.mxu0 0.0
      %1019 = vmatpush1.msra.mxu0 0.0
      %1020 = vmatprep.subr.mxu0 0.0
      %1021 = vmatpush1.msra.mxu0 0.0
      %1022 = vmatprep.subr.mxu0 0.0
      %1023 = vmatpush1.msra.mxu0 0.0
      %1024 = vmatprep.subr.mxu0 0.0
      %1025 = vmatpush1.msra.mxu0 0.0
      %1026 = vmatprep.subr.mxu0 0.0
      %1027 = vmatpush1.msra.mxu0 0.0
      %1028 = vmatprep.subr.mxu0 0.0
      %1029 = vmatpush1.msra.mxu0 0.0
      %1030 = vmatprep.subr.mxu0 0.0
      %1031 = vmatpush1.msra.mxu0 0.0
      %1032 = vmatprep.subr.mxu0 0.0
      %1033 = vmatpush1.msra.mxu0 0.0
      %1034 = vmatprep.subr.mxu0 0.0
      %1035 = vmatpush1.msra.mxu0 0.0
      %1036 = vmatprep.subr.mxu0 0.0
      %1037 = vmatpush1.msra.mxu0 0.0
      %1038 = vmatprep.subr.mxu0 0.0
      %1039 = vmatpush1.msra.mxu0 0.0
      %1040 = vmatprep.subr.mxu0 0.0
      %1041 = vmatpush1.msra.mxu0 0.0
      %1042 = vmatprep.subr.mxu0 0.0
      %1043 = vmatpush1.msra.mxu0 0.0
      %1044 = vmatprep.subr.mxu0 0.0
      %1045 = vmatpush1.msra.mxu0 0.0
      %1046 = vmatprep.subr.mxu0 0.0
      %1047 = vmatpush1.msra.mxu0 0.0
      %1048 = vmatprep.subr.mxu0 0.0
      %1049 = vmatpush1.msra.mxu0 0.0
      %1050 = vmatprep.subr.mxu0 0.0
      %1051 = vmatpush1.msra.mxu0 0.0
      %1052 = vmatprep.subr.mxu0 0.0
      %1053 = vmatpush1.msra.mxu0 0.0
      %1054 = vmatprep.subr.mxu0 0.0
      %1055 = vmatpush1.msra.mxu0 0.0
      %1056 = vmatprep.subr.mxu0 0.0
      %1057 = vmatpush1.msra.mxu0 0.0
      %1058 = vmatprep.subr.mxu0 0.0
      %1059 = vmatpush1.msra.mxu0 0.0
      %1060 = vmatprep.subr.mxu0 0.0
      %1061 = vmatpush1.msra.mxu0 0.0
      %1062 = vmatprep.subr.mxu0 0.0
      %1063 = vmatpush1.msra.mxu0 0.0
      %1064 = vmatprep.mubr.f32.mxu0 0.0
      %1065 = vmatmul.mubr.f32.gmra.mrb[0].mxu0 %v995
      %v1066 = vpop.f32.mrb[0].mxu0
      %v1067 = vadd.f32 %v987, %v1066
      %v1068 = vpop.f32.mrb[0].mxu0
      %v1069 = vadd.f32 %v987, %v1068
      %1070 = vmatprep.mubr.f32.mxu0 0.0
      %1071 = vmatmul.mubr.f32.gmra.mrb[0].mxu0 %v998
      %v1072 = vpop.f32.mrb[0].mxu0
      %v1073 = vadd.f32 %v992, %v1072
      %v1074 = vpop.f32.mrb[0].mxu0
      %v1075 = vadd.f32 %v992, %v1074
      %1076 = vdwg.mxu0
      %1077 = vmatprep.subr.mxu0 0.0
      %1078 = vmatpush1.msra.mxu0 %v957
      %1079 = vmatprep.subr.mxu0 0.0
      %1080 = vmatpush1.msra.mxu0 %v960
      %1081 = vmatprep.subr.mxu0 0.0
      %1082 = vmatpush1.msra.mxu0 %v963
      %1083 = vmatprep.subr.mxu0 0.0
      %1084 = vmatpush1.msra.mxu0 %v966
      %1085 = vmatprep.subr.mxu0 0.0
      %1086 = vmatpush1.msra.mxu0 %v969
      %1087 = vmatprep.subr.mxu0 0.0
      %1088 = vmatpush1.msra.mxu0 %v972
      %1089 = vmatprep.subr.mxu0 0.0
      %1090 = vmatpush1.msra.mxu0 %v975
      %1091 = vmatprep.subr.mxu0 0.0
      %1092 = vmatpush1.msra.mxu0 %v978
      %1093 = vmatprep.subr.mxu0 0.0
      %1094 = vmatpush1.msra.mxu0 %v981
      %1095 = vmatprep.subr.mxu0 0.0
      %1096 = vmatpush1.msra.mxu0 0.0
      %1097 = vmatprep.subr.mxu0 0.0
      %1098 = vmatpush1.msra.mxu0 0.0
      %1099 = vmatprep.subr.mxu0 0.0
      %1100 = vmatpush1.msra.mxu0 0.0
      %1101 = vmatprep.subr.mxu0 0.0
      %1102 = vmatpush1.msra.mxu0 0.0
      %1103 = vmatprep.subr.mxu0 0.0
      %1104 = vmatpush1.msra.mxu0 0.0
      %1105 = vmatprep.subr.mxu0 0.0
      %1106 = vmatpush1.msra.mxu0 0.0
      %1107 = vmatprep.subr.mxu0 0.0
      %1108 = vmatpush1.msra.mxu0 0.0
      %1109 = vmatprep.subr.mxu0 0.0
      %1110 = vmatpush1.msra.mxu0 0.0
      %1111 = vmatprep.subr.mxu0 0.0
      %1112 = vmatpush1.msra.mxu0 0.0
      %1113 = vmatprep.subr.mxu0 0.0
      %1114 = vmatpush1.msra.mxu0 0.0
      %1115 = vmatprep.subr.mxu0 0.0
      %1116 = vmatpush1.msra.mxu0 0.0
      %1117 = vmatprep.subr.mxu0 0.0
      %1118 = vmatpush1.msra.mxu0 0.0
      %1119 = vmatprep.subr.mxu0 0.0
      %1120 = vmatpush1.msra.mxu0 0.0
      %1121 = vmatprep.subr.mxu0 0.0
      %1122 = vmatpush1.msra.mxu0 0.0
      %1123 = vmatprep.subr.mxu0 0.0
      %1124 = vmatpush1.msra.mxu0 0.0
      %1125 = vmatprep.subr.mxu0 0.0
      %1126 = vmatpush1.msra.mxu0 0.0
      %1127 = vmatprep.subr.mxu0 0.0
      %1128 = vmatpush1.msra.mxu0 0.0
      %1129 = vmatprep.subr.mxu0 0.0
      %1130 = vmatpush1.msra.mxu0 0.0
      %1131 = vmatprep.subr.mxu0 0.0
      %1132 = vmatpush1.msra.mxu0 0.0
      %1133 = vmatprep.subr.mxu0 0.0
      %1134 = vmatpush1.msra.mxu0 0.0
      %1135 = vmatprep.subr.mxu0 0.0
      %1136 = vmatpush1.msra.mxu0 0.0
      %1137 = vmatprep.subr.mxu0 0.0
      %1138 = vmatpush1.msra.mxu0 0.0
      %1139 = vmatprep.subr.mxu0 0.0
      %1140 = vmatpush1.msra.mxu0 0.0
      %1141 = vmatprep.mubr.f32.mxu0 0.0
      %1142 = vmatmul.mubr.f32.gmra.mrb[0].mxu0 %v995
      %v1143 = vpop.f32.mrb[0].mxu0
      %v1144 = vadd.f32 %v987, %v1143
      %v1145 = vpop.f32.mrb[0].mxu0
      %1146 = vmatprep.mubr.f32.mxu0 0.0
      %1147 = vmatmul.mubr.f32.gmra.mrb[0].mxu0 %v998
      %v1148 = vpop.f32.mrb[0].mxu0
      %v1149 = vadd.f32 %v992, %v1148
      %v1150 = vpop.f32.mrb[0].mxu0
      %1151 = vdwg.mxu0
      %v1152 = vmax.f32 %v1067, 0.0
      %v1153 = vmax.f32 %v1069, 0.0
      %v1154 = vmax.f32 %v1144, 0.0
      %v1155 = vmax.f32 %v1073, 0.0
      %v1156 = vmax.f32 %v1075, 0.0
      %v1157 = vmax.f32 %v1149, 0.0
      %1158 = vst [vmem:[%s251] sm:$0xff] %v1152
      %1159 = vst [vmem:[%s251 + $0x8] sm:$0xff] %v1153
      %1160 = vst [vmem:[%s251 + $0x10] sm:$0xff] %v1154
      %1161 = vst [vmem:[%s251 + $0x18] sm:$0xff] %v1155
      %1162 = vst [vmem:[%s251 + $0x20] sm:$0xff] %v1156
      %1163 = vst [vmem:[%s251 + $0x28] sm:$0xff] %v1157
      %p1164 = scmp.lt.s32.totalorder %s17, 1
      %s1165 = scalar_select %p1164, %s17, 1
      %s1166 = smul.addr %s1165, 6
      %s1167 = smul.addr %s1166, 8
      %s1168 = scalar_lea.vmem %s6, %s1167
      // Predicated region
      $region45: #{decoder_block_forward.1} parent=43 // pred_check
        %p1169 = pneg %p166
      $region46: #{decoder_block_forward.1} parent=43 // pred_check_branch
        %1171 = sbr.rel (%p1169) target = $region48
      $region47: #{decoder_block_forward.1} parent=43 // pred_region
        _
      $region48: #{decoder_block_forward.1} parent=43 // pred_fallthru
        _
    $region44: #{decoder_block_forward.1} parent=5 // pred_fallthru
      _
    %p1172 = scmp.le.s32.totalorder 2, %s12
    // Predicated region
    $region49: #{decoder_block_forward.1} parent=5 // pred_check
      %p1173 = pneg %p1172
    $region50: #{decoder_block_forward.1} parent=5 // pred_check_branch
      %1175 = sbr.rel (%p1173) target = $region52
    $region51: #{decoder_block_forward.1} parent=5 // pred_region
      %s1176 = ssub.s32 %s12, 2
      // Predicated region
      $region53: #{decoder_block_forward.1} parent=51 // pred_check
        %p1177 = pneg %p172
      $region54: #{decoder_block_forward.1} parent=51 // pred_check_branch
        %1179 = sbr.rel (%p1177) target = $region56
      $region55: #{decoder_block_forward.1} parent=51 // pred_region
        %p1180 = scmp.lt.s32.totalorder %s18, 1
        %s1181 = scalar_select %p1180, %s18, 1
        %s1182 = smul.addr %s1181, 6
        %s1183 = smul.addr %s1182, 8
        %s1184 = scalar_lea.vmem %s6, %s1183
      $region56: #{decoder_block_forward.1} parent=51 // pred_fallthru
        _
    $region52: #{decoder_block_forward.1} parent=5 // pred_fallthru
      _
  $region6: #{decoder_block_forward.1} parent=0 // loop_footer
    %s16 = sadd.s32 1, %s12
  $region7: #{decoder_block_forward.1} parent=0 // loop_footer_branch
    %11 = sbr.rel target = $region3
  $region8: #{decoder_block_forward.1} parent=0 // loop_exit
    _

</llo_original>
